<compile_context>
chip_gen: v5e
topology: v5e:2x2
jax: 0.10.0
libtpu: 0.0.40
codegen_flags: <defaults>
</compile_context>

<pallas_src>
import jax
import jax.numpy as jnp
from jax import lax
from jax.experimental import pallas as pl
from jax.experimental.pallas import tpu as pltpu

EPS = 1e-5

# Tile caps (re-derived for v7x's 64 MiB VMEM; also fine on v5e/v6e):
#   A: 512x512 bf16 = 512 KiB, B: 512x256 bf16 = 256 KiB (x2 for double-buffering),
#   acc: 512x256 f32 = 512 KiB  ->  ~2.5 MiB total, far under the scoped limit.
_TM, _TN, _TK = 512, 256, 512
_VMEM_LIMIT = 48 * 1024 * 1024  # leave headroom under v7x's 64 MiB physical VMEM


def _round_up(x, m):
    return (x + m - 1) // m * m


def _pad2d(a, rows, cols):
    r, c = a.shape
    if r == rows and c == cols:
        return a
    return jnp.pad(a, ((0, rows - r), (0, cols - c)))


# ----------------------------- Pallas kernels (hot path) -----------------------------

def _bn_relu_kernel(x_ref, scale_ref, shift_ref, o_ref):
    # y = relu(x * scale + shift)  (folded BatchNorm); compute f32, store bf16.
    y = jnp.maximum(x_ref[...] * scale_ref[...] + shift_ref[...], 0.0)
    o_ref[...] = y.astype(o_ref.dtype)


def _mm_bn_relu_kernel(a_ref, b_ref, scale_ref, shift_ref, o_ref, acc_ref):
    # conv1-as-matmul: bf16 operands, f32 accumulator, fused bn2+relu epilogue.
    @pl.when(pl.program_id(2) == 0)
    def _():
        acc_ref[...] = jnp.zeros_like(acc_ref)

    acc_ref[...] += jnp.dot(a_ref[...], b_ref[...], preferred_element_type=jnp.float32)

    @pl.when(pl.program_id(2) == pl.num_programs(2) - 1)
    def _():
        o_ref[...] = jnp.maximum(
            acc_ref[...] * scale_ref[...] + shift_ref[...], 0.0).astype(o_ref.dtype)


def _mm_add_skip_kernel(a_ref, b_ref, skip_ref, o_ref, acc_ref):
    # conv2-as-matmul with fused identity-residual add (equalInOut path).
    @pl.when(pl.program_id(2) == 0)
    def _():
        acc_ref[...] = jnp.zeros_like(acc_ref)

    acc_ref[...] += jnp.dot(a_ref[...], b_ref[...], preferred_element_type=jnp.float32)

    @pl.when(pl.program_id(2) == pl.num_programs(2) - 1)
    def _():
        o_ref[...] = (acc_ref[...] + skip_ref[...]).astype(o_ref.dtype)


def _mm_fused_shortcut_kernel(a_ref, b_ref, a2_ref, b2_ref, o_ref, acc_ref):
    # conv2-as-matmul with the 1x1 shortcut conv fused into the same accumulator
    # (not-equalInOut path): acc = hs @ ws + sum_k p2 @ w2.
    @pl.when(pl.program_id(2) == 0)
    def _():
        acc_ref[...] = jnp.dot(a2_ref[...], b2_ref[...],
                               preferred_element_type=jnp.float32)

    acc_ref[...] += jnp.dot(a_ref[...], b_ref[...], preferred_element_type=jnp.float32)

    @pl.when(pl.program_id(2) == pl.num_programs(2) - 1)
    def _():
        o_ref[...] = acc_ref[...].astype(o_ref.dtype)


# ----------------------------- pallas_call wrappers -----------------------------

def _bn_relu(x2d, scale, shift):
    # Tiled elementwise bn+relu over rows; bf16 output (feeds MXU operands only).
    M, C = x2d.shape
    tm = min(1024, _round_up(M, 8))
    Mp = _round_up(M, tm)
    xp = _pad2d(x2d, Mp, C)
    out = pl.pallas_call(
        _bn_relu_kernel,
        out_shape=jax.ShapeDtypeStruct((Mp, C), jnp.bfloat16),
        grid=(Mp // tm,),
        in_specs=[pl.BlockSpec((tm, C), lambda i: (i, 0)),
                  pl.BlockSpec((1, C), lambda i: (0, 0)),
                  pl.BlockSpec((1, C), lambda i: (0, 0))],
        out_specs=pl.BlockSpec((tm, C), lambda i: (i, 0)),
        compiler_params=pltpu.CompilerParams(
            dimension_semantics=("parallel",),
            vmem_limit_bytes=_VMEM_LIMIT),
    )(xp, scale, shift)
    return out[:M]


def _conv_matmul(kernel, a, b, extras, out_dtype):
    """Tiled (M,K)x(K,N) matmul with fused epilogue inputs.

    extras: list of (array, kind) with kind in
      'col'  -> (1, N)  per-output-channel vector (bn scale/shift)
      'full' -> (M, N)  residual tile (f32)
      'lhs2' -> (M, K2) shortcut lhs (bf16), K2 kept whole
      'rhs2' -> (K2, N) shortcut rhs (bf16)
    All dims are zero-padded to tile multiples (N/K to 128-multiples -> lane-dense,
    unmasked stores); padding is sliced off before returning.
    """
    M, K = a.shape
    N = b.shape[1]
    tm = min(_TM, _round_up(M, 8))
    tn = min(_TN, _round_up(N, 128))
    tk = min(_TK, _round_up(K, 128))
    Mp, Kp, Np = _round_up(M, tm), _round_up(K, tk), _round_up(N, tn)

    args = [_pad2d(a, Mp, Kp), _pad2d(b, Kp, Np)]
    in_specs = [pl.BlockSpec((tm, tk), lambda i, j, k: (i, k)),
                pl.BlockSpec((tk, tn), lambda i, j, k: (k, j))]
    for arr, kind in extras:
        if kind == 'col':
            args.append(_pad2d(arr, 1, Np))
            in_specs.append(pl.BlockSpec((1, tn), lambda i, j, k: (0, j)))
        elif kind == 'full':
            args.append(_pad2d(arr, Mp, Np))
            in_specs.append(pl.BlockSpec((tm, tn), lambda i, j, k: (i, j)))
        elif kind == 'lhs2':
            K2 = _round_up(arr.shape[1], 128)
            args.append(_pad2d(arr, Mp, K2))
            in_specs.append(pl.BlockSpec((tm, K2), lambda i, j, k: (i, 0)))
        elif kind == 'rhs2':
            K2 = _round_up(arr.shape[0], 128)
            args.append(_pad2d(arr, K2, Np))
            in_specs.append(pl.BlockSpec((K2, tn), lambda i, j, k: (0, j)))
        else:
            raise ValueError(kind)

    out = pl.pallas_call(
        kernel,
        out_shape=jax.ShapeDtypeStruct((Mp, Np), out_dtype),
        grid=(Mp // tm, Np // tn, Kp // tk),
        in_specs=in_specs,
        out_specs=pl.BlockSpec((tm, tn), lambda i, j, k: (i, j)),
        scratch_shapes=[pltpu.VMEM((tm, tn), jnp.float32)],
        compiler_params=pltpu.CompilerParams(
            dimension_semantics=("parallel", "parallel", "arbitrary"),
            vmem_limit_bytes=_VMEM_LIMIT),
    )(*args)
    return out[:M, :N]


# ----------------------------- JAX glue (layout only) -----------------------------

def _im2col(x, ksize, stride, pad):
    # x: (N, H, W, C) -> (N*Ho*Wo, ksize*ksize*C); pure layout plumbing (bf16 in/out).
    N, H, W, C = x.shape
    xp = jnp.pad(x, ((0, 0), (pad, pad), (pad, pad), (0, 0)))
    Ho = (H + 2 * pad - ksize) // stride + 1
    Wo = (W + 2 * pad - ksize) // stride + 1
    cols = []
    for ky in range(ksize):
        for kx in range(ksize):
            patch = lax.slice(
                xp,
                (0, ky, kx, 0),
                (N, ky + stride * (Ho - 1) + 1, kx + stride * (Wo - 1) + 1, C),
                (1, stride, stride, 1))
            cols.append(patch.reshape(N * Ho * Wo, C))
    return jnp.concatenate(cols, axis=1), Ho, Wo


def _fold_bn(gamma, beta, mean, var):
    scale = gamma / jnp.sqrt(var + EPS)
    shift = beta - mean * scale
    return scale.reshape(1, -1), shift.reshape(1, -1)


def basic_block_forward(x_nchw, params, stride, equal_in_out):
    x = jnp.transpose(x_nchw, (0, 2, 3, 1)).astype(jnp.float32)  # NCHW -> NHWC
    N, H, W, Cin = x.shape
    Cout = params['w1'].shape[-1]

    # h = relu(bn1(x))  -- conv1 input (and shortcut input when not equalInOut)
    s1, b1 = _fold_bn(*params['bn1'])
    h2d = _bn_relu(x.reshape(N * H * W, Cin), s1, b1)            # bf16
    h = h2d.reshape(N, H, W, Cin)

    # conv1 (3x3, stride, pad 1) with fused bn2+relu epilogue; bf16 output.
    p1, Ho, Wo = _im2col(h, 3, stride, 1)
    w1 = params['w1'].reshape(9 * Cin, Cout).astype(jnp.bfloat16)
    s2, b2 = _fold_bn(*params['bn2'])
    t2d = _conv_matmul(_mm_bn_relu_kernel, p1, w1,
                       [(s2, 'col'), (b2, 'col')], jnp.bfloat16)
    # TODO(synk): F.dropout with dropRate > 0 (training-mode RNG) not implemented;
    # module default dropRate=0.0 makes it an identity here.
    t = t2d.reshape(N, Ho, Wo, Cout)
    M1 = N * Ho * Wo

    # conv2 (3x3, stride 1, pad 1) with the residual fused into the same kernel.
    p2, _, _ = _im2col(t, 3, 1, 1)
    w2 = params['w2'].reshape(9 * Cout, Cout).astype(jnp.bfloat16)
    if equal_in_out:
        # identity skip = original x (stride is 1 on this path), added in f32.
        skip2d = x.reshape(M1, Cout)
        o2d = _conv_matmul(_mm_add_skip_kernel, p2, w2,
                           [(skip2d, 'full')], jnp.float32)
    else:
        # 1x1 shortcut conv on strided h, fused into conv2's accumulator.
        hs = h[:, ::stride, ::stride, :].reshape(M1, Cin)         # bf16
        ws = params['ws'].reshape(Cin, Cout).astype(jnp.bfloat16)
        o2d = _conv_matmul(_mm_fused_shortcut_kernel, p2, w2,
                           [(hs, 'lhs2'), (ws, 'rhs2')], jnp.float32)

    out = o2d.reshape(N, Ho, Wo, Cout)
    return jnp.transpose(out, (0, 3, 1, 2))                       # NHWC -> NCHW


# ----------------------------- params + pure-JAX reference -----------------------------

def init_params(key, in_planes, out_planes):
    ks = jax.random.split(key, 11)

    def bn(k1, k2, k3, k4, c):
        gamma = 1.0 + 0.1 * jax.random.normal(k1, (c,), jnp.float32)
        beta = 0.1 * jax.random.normal(k2, (c,), jnp.float32)
        mean = 0.1 * jax.random.normal(k3, (c,), jnp.float32)
        var = 1.0 + 0.1 * jax.random.uniform(k4, (c,), jnp.float32)
        return (gamma, beta, mean, var)

    # Conv weights stored directly in HWIO (PyTorch uses OIHW; synthetic init, no checkpoint).
    params = {
        'bn1': bn(ks[0], ks[1], ks[2], ks[3], in_planes),
        'w1': 0.1 * jax.random.normal(ks[4], (3, 3, in_planes, out_planes), jnp.float32),
        'bn2': bn(ks[5], ks[6], ks[7], ks[8], out_planes),
        'w2': 0.1 * jax.random.normal(ks[9], (3, 3, out_planes, out_planes), jnp.float32),
    }
    if in_planes != out_planes:
        params['ws'] = 0.1 * jax.random.normal(ks[10], (1, 1, in_planes, out_planes), jnp.float32)
    return params


def ref_forward(x_nchw, params, stride, equal_in_out):
    x = jnp.transpose(x_nchw, (0, 2, 3, 1)).astype(jnp.float32)
    dn = ('NHWC', 'HWIO', 'NHWC')

    def bn_relu(v, p):
        g, b, m, var = p
        return jnp.maximum((v - m) / jnp.sqrt(var + EPS) * g + b, 0.0)

    h = bn_relu(x, params['bn1'])
    t = lax.conv_general_dilated(h, params['w1'], (stride, stride), ((1, 1), (1, 1)),
                                 dimension_numbers=dn)
    t = bn_relu(t, params['bn2'])
    out = lax.conv_general_dilated(t, params['w2'], (1, 1), ((1, 1), (1, 1)),
                                   dimension_numbers=dn)
    if equal_in_out:
        skip = x
    else:
        skip = lax.conv_general_dilated(h, params['ws'], (stride, stride), ((0, 0), (0, 0)),
                                        dimension_numbers=dn)
    return jnp.transpose(skip + out, (0, 3, 1, 2))


# ----------------------------- main -----------------------------

if __name__ == "__main__":
    key = jax.random.PRNGKey(0)
    kx, kp1, kp2 = jax.random.split(key, 3)

    fwd = jax.jit(basic_block_forward, static_argnums=(2, 3))

    # Case 1: in_planes != out_planes, stride 2  -> fused 1x1 conv shortcut path
    x = jax.random.normal(kx, (2, 4, 16, 16), jnp.float32)  # NCHW like PyTorch
    params = init_params(kp1, 4, 8)
    y = jax.block_until_ready(fwd(x, params, 2, False))
    y_ref = ref_forward(x, params, 2, False)
    assert y.shape == (2, 8, 8, 8)
    assert float(jnp.max(jnp.abs(y - y_ref))) < 5e-2

    # Case 2: in_planes == out_planes, stride 1  -> identity shortcut path
    x2 = jax.random.normal(kx, (2, 8, 16, 16), jnp.float32)
    params2 = init_params(kp2, 8, 8)
    y2 = jax.block_until_ready(fwd(x2, params2, 1, True))
    y2_ref = ref_forward(x2, params2, 1, True)
    assert y2.shape == (2, 8, 16, 16)
    assert float(jnp.max(jnp.abs(y2 - y2_ref))) < 5e-2

    print("KERNEL_OK")
</pallas_src>

<mosaic_0001>
module attributes {stable_mosaic.version = 11 : i64} {
  func.func @_bn_relu_kernel(%arg0: i32, %arg1: memref<512x4xf32, #tpu.memory_space<vmem>>, %arg2: memref<1x4xf32, #tpu.memory_space<vmem>>, %arg3: memref<1x4xf32, #tpu.memory_space<vmem>>, %arg4: memref<512x4xbf16, #tpu.memory_space<vmem>>) attributes {dimension_semantics = [#tpu.dimension_semantics<parallel>], iteration_bounds = array<i64: 1>, scalar_prefetch = 0 : i64, scratch_operands = 0 : i64, tpu.core_type = #tpu.core_type<tc>, window_params = [{transform_indices = @transform_0, window_bounds = array<i64: 512, 4>}, {pipeline_mode = #tpu.pipeline_mode<synchronous>, transform_indices = @transform_1, window_bounds = array<i64: 1, 4>}, {pipeline_mode = #tpu.pipeline_mode<synchronous>, transform_indices = @transform_2, window_bounds = array<i64: 1, 4>}, {transform_indices = @transform_3, window_bounds = array<i64: 512, 4>}]} {
    %c0 = arith.constant 0 : index
    %c0_0 = arith.constant 0 : index
    %0 = vector.load %arg1[%c0, %c0_0] : memref<512x4xf32, #tpu.memory_space<vmem>>, vector<512x4xf32>
    %c0_1 = arith.constant 0 : index
    %c0_2 = arith.constant 0 : index
    %1 = vector.load %arg2[%c0_1, %c0_2] : memref<1x4xf32, #tpu.memory_space<vmem>>, vector<1x4xf32>
    %2 = vector.broadcast %1 : vector<1x4xf32> to vector<512x4xf32>
    %3 = arith.mulf %0, %2 : vector<512x4xf32>
    %c0_3 = arith.constant 0 : index
    %c0_4 = arith.constant 0 : index
    %4 = vector.load %arg3[%c0_3, %c0_4] : memref<1x4xf32, #tpu.memory_space<vmem>>, vector<1x4xf32>
    %5 = vector.broadcast %4 : vector<1x4xf32> to vector<512x4xf32>
    %6 = arith.addf %3, %5 : vector<512x4xf32>
    %cst = arith.constant 0.000000e+00 : f32
    %7 = vector.broadcast %cst : f32 to vector<512x4xf32>
    %8 = arith.maximumf %6, %7 : vector<512x4xf32>
    %9 = arith.truncf %8 : vector<512x4xf32> to vector<512x4xbf16>
    %c0_5 = arith.constant 0 : index
    %c0_6 = arith.constant 0 : index
    %10 = vector.load %arg4[%c0_5, %c0_6] : memref<512x4xbf16, #tpu.memory_space<vmem>>, vector<512x4xbf16>
    tpu.vector_store %arg4[%c0_5, %c0_6], %9 {strides = array<i32>} : memref<512x4xbf16, #tpu.memory_space<vmem>>, vector<512x4xbf16>,
    return
  }
  func.func @transform_0(%arg0: i32) -> (i32, i32) {
    %c0_i32 = arith.constant 0 : i32
    %c0_i32_0 = arith.constant 0 : i32
    return %arg0, %c0_i32 : i32, i32
  }
  func.func @transform_1(%arg0: i32) -> (i32, i32) {
    %c0_i32 = arith.constant 0 : i32
    %c0_i32_0 = arith.constant 0 : i32
    %c0_i32_1 = arith.constant 0 : i32
    return %c0_i32, %c0_i32_0 : i32, i32
  }
  func.func @transform_2(%arg0: i32) -> (i32, i32) {
    %c0_i32 = arith.constant 0 : i32
    %c0_i32_0 = arith.constant 0 : i32
    %c0_i32_1 = arith.constant 0 : i32
    return %c0_i32, %c0_i32_0 : i32, i32
  }
  func.func @transform_3(%arg0: i32) -> (i32, i32) {
    %c0_i32 = arith.constant 0 : i32
    %c0_i32_0 = arith.constant 0 : i32
    return %arg0, %c0_i32 : i32, i32
  }
}

module attributes {stable_mosaic.version = 11 : i64} {
  func.func @_mm_bn_relu_kernel(%arg0: i32, %arg1: i32, %arg2: i32, %arg3: memref<128x128xbf16, #tpu.memory_space<vmem>>, %arg4: memref<128x128xbf16, #tpu.memory_space<vmem>>, %arg5: memref<1x128xf32, #tpu.memory_space<vmem>>, %arg6: memref<1x128xf32, #tpu.memory_space<vmem>>, %arg7: memref<128x128xbf16, #tpu.memory_space<vmem>>, %arg8: memref<128x128xf32, #tpu.memory_space<vmem>>) attributes {dimension_semantics = [#tpu.dimension_semantics<parallel>, #tpu.dimension_semantics<parallel>, #tpu.dimension_semantics<arbitrary>], iteration_bounds = array<i64: 1, 1, 1>, scalar_prefetch = 0 : i64, scratch_operands = 1 : i64, tpu.core_type = #tpu.core_type<tc>, window_params = [{transform_indices = @transform_0, window_bounds = array<i64: 128, 128>}, {transform_indices = @transform_1, window_bounds = array<i64: 128, 128>}, {transform_indices = @transform_2, window_bounds = array<i64: 1, 128>}, {transform_indices = @transform_3, window_bounds = array<i64: 1, 128>}, {transform_indices = @transform_4, window_bounds = array<i64: 128, 128>}]} {
    %c0_i32 = arith.constant 0 : i32
    %0 = arith.cmpi eq, %arg2, %c0_i32 : i32
    %1 = arith.extui %0 : i1 to i32
    %c0_i32_0 = arith.constant 0 : i32
    %2 = arith.cmpi ne, %1, %c0_i32_0 : i32
    scf.if %2 {
      %cst_10 = arith.constant 0.000000e+00 : f32
      %12 = vector.broadcast %cst_10 : f32 to vector<128x128xf32>
      %c0_11 = arith.constant 0 : index
      %c0_12 = arith.constant 0 : index
      %13 = vector.load %arg8[%c0_11, %c0_12] : memref<128x128xf32, #tpu.memory_space<vmem>>, vector<128x128xf32>
      tpu.vector_store %arg8[%c0_11, %c0_12], %12 {strides = array<i32>} : memref<128x128xf32, #tpu.memory_space<vmem>>, vector<128x128xf32>,
    } else {
    }
    %c0 = arith.constant 0 : index
    %c0_1 = arith.constant 0 : index
    %3 = vector.load %arg8[%c0, %c0_1] : memref<128x128xf32, #tpu.memory_space<vmem>>, vector<128x128xf32>
    %c0_2 = arith.constant 0 : index
    %c0_3 = arith.constant 0 : index
    %4 = vector.load %arg3[%c0_2, %c0_3] : memref<128x128xbf16, #tpu.memory_space<vmem>>, vector<128x128xbf16>
    %c0_4 = arith.constant 0 : index
    %c0_5 = arith.constant 0 : index
    %5 = vector.load %arg4[%c0_4, %c0_5] : memref<128x128xbf16, #tpu.memory_space<vmem>>, vector<128x128xbf16>
    %cst = arith.constant dense<0.000000e+00> : vector<128x128xf32>
    %6 = tpu.matmul %4, %5, %cst {dimension_numbers = #tpu.dot_dimension_numbers<[1], [0], [0], [1], [0, 0, 1, 1], [], []>} : vector<128x128xbf16>, vector<128x128xbf16>, vector<128x128xf32> -> vector<128x128xf32>
    %7 = arith.addf %3, %6 : vector<128x128xf32>
    %c0_6 = arith.constant 0 : index
    %c0_7 = arith.constant 0 : index
    %8 = vector.load %arg8[%c0_6, %c0_7] : memref<128x128xf32, #tpu.memory_space<vmem>>, vector<128x128xf32>
    tpu.vector_store %arg8[%c0_6, %c0_7], %7 {strides = array<i32>} : memref<128x128xf32, #tpu.memory_space<vmem>>, vector<128x128xf32>,
    %c0_i32_8 = arith.constant 0 : i32
    %9 = arith.cmpi eq, %arg2, %c0_i32_8 : i32
    %10 = arith.extui %9 : i1 to i32
    %c0_i32_9 = arith.constant 0 : i32
    %11 = arith.cmpi ne, %10, %c0_i32_9 : i32
    scf.if %11 {
      %c0_10 = arith.constant 0 : index
      %c0_11 = arith.constant 0 : index
      %12 = vector.load %arg8[%c0_10, %c0_11] : memref<128x128xf32, #tpu.memory_space<vmem>>, vector<128x128xf32>
      %c0_12 = arith.constant 0 : index
      %c0_13 = arith.constant 0 : index
      %13 = vector.load %arg5[%c0_12, %c0_13] : memref<1x128xf32, #tpu.memory_space<vmem>>, vector<1x128xf32>
      %14 = vector.broadcast %13 : vector<1x128xf32> to vector<128x128xf32>
      %15 = arith.mulf %12, %14 : vector<128x128xf32>
      %c0_14 = arith.constant 0 : index
      %c0_15 = arith.constant 0 : index
      %16 = vector.load %arg6[%c0_14, %c0_15] : memref<1x128xf32, #tpu.memory_space<vmem>>, vector<1x128xf32>
      %17 = vector.broadcast %16 : vector<1x128xf32> to vector<128x128xf32>
      %18 = arith.addf %15, %17 : vector<128x128xf32>
      %cst_16 = arith.constant 0.000000e+00 : f32
      %19 = vector.broadcast %cst_16 : f32 to vector<128x128xf32>
      %20 = arith.maximumf %18, %19 : vector<128x128xf32>
      %21 = arith.truncf %20 : vector<128x128xf32> to vector<128x128xbf16>
      %c0_17 = arith.constant 0 : index
      %c0_18 = arith.constant 0 : index
      %22 = vector.load %arg7[%c0_17, %c0_18] : memref<128x128xbf16, #tpu.memory_space<vmem>>, vector<128x128xbf16>
      tpu.vector_store %arg7[%c0_17, %c0_18], %21 {strides = array<i32>} : memref<128x128xbf16, #tpu.memory_space<vmem>>, vector<128x128xbf16>,
    } else {
    }
    return
  }
  func.func @transform_0(%arg0: i32, %arg1: i32, %arg2: i32) -> (i32, i32) {
    %c0_i32 = arith.constant 0 : i32
    return %arg0, %arg2 : i32, i32
  }
  func.func @transform_1(%arg0: i32, %arg1: i32, %arg2: i32) -> (i32, i32) {
    %c0_i32 = arith.constant 0 : i32
    return %arg2, %arg1 : i32, i32
  }
  func.func @transform_2(%arg0: i32, %arg1: i32, %arg2: i32) -> (i32, i32) {
    %c0_i32 = arith.constant 0 : i32
    %c0_i32_0 = arith.constant 0 : i32
    return %c0_i32, %arg1 : i32, i32
  }
  func.func @transform_3(%arg0: i32, %arg1: i32, %arg2: i32) -> (i32, i32) {
    %c0_i32 = arith.constant 0 : i32
    %c0_i32_0 = arith.constant 0 : i32
    return %c0_i32, %arg1 : i32, i32
  }
  func.func @transform_4(%arg0: i32, %arg1: i32, %arg2: i32) -> (i32, i32) {
    %c0_i32 = arith.constant 0 : i32
    return %arg0, %arg1 : i32, i32
  }
}

module attributes {stable_mosaic.version = 11 : i64} {
  func.func @_mm_fused_shortcut_kernel(%arg0: i32, %arg1: i32, %arg2: i32, %arg3: memref<128x128xbf16, #tpu.memory_space<vmem>>, %arg4: memref<128x128xbf16, #tpu.memory_space<vmem>>, %arg5: memref<128x128xbf16, #tpu.memory_space<vmem>>, %arg6: memref<128x128xbf16, #tpu.memory_space<vmem>>, %arg7: memref<128x128xf32, #tpu.memory_space<vmem>>, %arg8: memref<128x128xf32, #tpu.memory_space<vmem>>) attributes {dimension_semantics = [#tpu.dimension_semantics<parallel>, #tpu.dimension_semantics<parallel>, #tpu.dimension_semantics<arbitrary>], iteration_bounds = array<i64: 1, 1, 1>, scalar_prefetch = 0 : i64, scratch_operands = 1 : i64, tpu.core_type = #tpu.core_type<tc>, window_params = [{transform_indices = @transform_0, window_bounds = array<i64: 128, 128>}, {transform_indices = @transform_1, window_bounds = array<i64: 128, 128>}, {transform_indices = @transform_2, window_bounds = array<i64: 128, 128>}, {transform_indices = @transform_3, window_bounds = array<i64: 128, 128>}, {transform_indices = @transform_4, window_bounds = array<i64: 128, 128>}]} {
    %c0_i32 = arith.constant 0 : i32
    %0 = arith.cmpi eq, %arg2, %c0_i32 : i32
    %1 = arith.extui %0 : i1 to i32
    %c0_i32_0 = arith.constant 0 : i32
    %2 = arith.cmpi ne, %1, %c0_i32_0 : i32
    scf.if %2 {
      %c0_10 = arith.constant 0 : index
      %c0_11 = arith.constant 0 : index
      %12 = vector.load %arg5[%c0_10, %c0_11] : memref<128x128xbf16, #tpu.memory_space<vmem>>, vector<128x128xbf16>
      %c0_12 = arith.constant 0 : index
      %c0_13 = arith.constant 0 : index
      %13 = vector.load %arg6[%c0_12, %c0_13] : memref<128x128xbf16, #tpu.memory_space<vmem>>, vector<128x128xbf16>
      %cst_14 = arith.constant dense<0.000000e+00> : vector<128x128xf32>
      %14 = tpu.matmul %12, %13, %cst_14 {dimension_numbers = #tpu.dot_dimension_numbers<[1], [0], [0], [1], [0, 0, 1, 1], [], []>} : vector<128x128xbf16>, vector<128x128xbf16>, vector<128x128xf32> -> vector<128x128xf32>
      %c0_15 = arith.constant 0 : index
      %c0_16 = arith.constant 0 : index
      %15 = vector.load %arg8[%c0_15, %c0_16] : memref<128x128xf32, #tpu.memory_space<vmem>>, vector<128x128xf32>
      tpu.vector_store %arg8[%c0_15, %c0_16], %14 {strides = array<i32>} : memref<128x128xf32, #tpu.memory_space<vmem>>, vector<128x128xf32>,
    } else {
    }
    %c0 = arith.constant 0 : index
    %c0_1 = arith.constant 0 : index
    %3 = vector.load %arg8[%c0, %c0_1] : memref<128x128xf32, #tpu.memory_space<vmem>>, vector<128x128xf32>
    %c0_2 = arith.constant 0 : index
    %c0_3 = arith.constant 0 : index
    %4 = vector.load %arg3[%c0_2, %c0_3] : memref<128x128xbf16, #tpu.memory_space<vmem>>, vector<128x128xbf16>
    %c0_4 = arith.constant 0 : index
    %c0_5 = arith.constant 0 : index
    %5 = vector.load %arg4[%c0_4, %c0_5] : memref<128x128xbf16, #tpu.memory_space<vmem>>, vector<128x128xbf16>
    %cst = arith.constant dense<0.000000e+00> : vector<128x128xf32>
    %6 = tpu.matmul %4, %5, %cst {dimension_numbers = #tpu.dot_dimension_numbers<[1], [0], [0], [1], [0, 0, 1, 1], [], []>} : vector<128x128xbf16>, vector<128x128xbf16>, vector<128x128xf32> -> vector<128x128xf32>
    %7 = arith.addf %3, %6 : vector<128x128xf32>
    %c0_6 = arith.constant 0 : index
    %c0_7 = arith.constant 0 : index
    %8 = vector.load %arg8[%c0_6, %c0_7] : memref<128x128xf32, #tpu.memory_space<vmem>>, vector<128x128xf32>
    tpu.vector_store %arg8[%c0_6, %c0_7], %7 {strides = array<i32>} : memref<128x128xf32, #tpu.memory_space<vmem>>, vector<128x128xf32>,
    %c0_i32_8 = arith.constant 0 : i32
    %9 = arith.cmpi eq, %arg2, %c0_i32_8 : i32
    %10 = arith.extui %9 : i1 to i32
    %c0_i32_9 = arith.constant 0 : i32
    %11 = arith.cmpi ne, %10, %c0_i32_9 : i32
    scf.if %11 {
      %c0_10 = arith.constant 0 : index
      %c0_11 = arith.constant 0 : index
      %12 = vector.load %arg8[%c0_10, %c0_11] : memref<128x128xf32, #tpu.memory_space<vmem>>, vector<128x128xf32>
      %c0_12 = arith.constant 0 : index
      %c0_13 = arith.constant 0 : index
      %13 = vector.load %arg7[%c0_12, %c0_13] : memref<128x128xf32, #tpu.memory_space<vmem>>, vector<128x128xf32>
      tpu.vector_store %arg7[%c0_12, %c0_13], %12 {strides = array<i32>} : memref<128x128xf32, #tpu.memory_space<vmem>>, vector<128x128xf32>,
    } else {
    }
    return
  }
  func.func @transform_0(%arg0: i32, %arg1: i32, %arg2: i32) -> (i32, i32) {
    %c0_i32 = arith.constant 0 : i32
    return %arg0, %arg2 : i32, i32
  }
  func.func @transform_1(%arg0: i32, %arg1: i32, %arg2: i32) -> (i32, i32) {
    %c0_i32 = arith.constant 0 : i32
    return %arg2, %arg1 : i32, i32
  }
  func.func @transform_2(%arg0: i32, %arg1: i32, %arg2: i32) -> (i32, i32) {
    %c0_i32 = arith.constant 0 : i32
    %c0_i32_0 = arith.constant 0 : i32
    return %arg0, %c0_i32 : i32, i32
  }
  func.func @transform_3(%arg0: i32, %arg1: i32, %arg2: i32) -> (i32, i32) {
    %c0_i32 = arith.constant 0 : i32
    %c0_i32_0 = arith.constant 0 : i32
    return %c0_i32, %arg1 : i32, i32
  }
  func.func @transform_4(%arg0: i32, %arg1: i32, %arg2: i32) -> (i32, i32) {
    %c0_i32 = arith.constant 0 : i32
    return %arg0, %arg1 : i32, i32
  }
}

</mosaic_0001>

<llo_original>
// kernel: basic_block_forward.3
$region0: #{basic_block_forward.3}
  #allocation0 [shape = 'u32[]', space=smem, size = 0x4, offset = 0x4, fixed_abs, tag = 'smem constant byte address 0x4 - core index']
  #allocation1 [shape = 'u32[72,128]{1,0:T(1,128)}', space=vmem, size = 0x9000, scoped, tag = 'internal scratch']
  %s0 = inlined_call_operand.vmem [shape: f32[512,4], index: 0, kind: input, shape index: {}]
  %s1 = inlined_call_operand.vmem [shape: f32[1,4], index: 1, kind: input, shape index: {}]
  %s2 = inlined_call_operand.vmem [shape: f32[1,4], index: 2, kind: input, shape index: {}]
  %s3 = inlined_call_operand.vmem [shape: bf16[512,4], index: 3, kind: output, shape index: {}]
  %s4 = sld [smem:[#allocation0]]
  $region22: #{basic_block_forward.3} parent=0
    _
  %s6 = ssub.s32 1, %s4
  %s7 = scalar_select 0, %s6, %s4
  // Predicated region
  $region2: #{basic_block_forward.3} parent=0 // pred_check
    _
  $region3: #{basic_block_forward.3} parent=0 // pred_check_branch
    %9 = sbr.rel (0) target = $region5
  $region4: #{basic_block_forward.3} parent=0 // pred_region
    _
  $region5: #{basic_block_forward.3} parent=0 // pred_fallthru
    _
  // Predicated region
  $region6: #{basic_block_forward.3} parent=0 // pred_check
    _
  $region7: #{basic_block_forward.3} parent=0 // pred_check_branch
    %11 = sbr.rel (0) target = $region9
  $region8: #{basic_block_forward.3} parent=0 // pred_region
    _
  $region9: #{basic_block_forward.3} parent=0 // pred_fallthru
    _
  // Predicated region
  $region10: #{basic_block_forward.3} parent=0 // pred_check
    _
  $region11: #{basic_block_forward.3} parent=0 // pred_check_branch
    %13 = sbr.rel (0) target = $region13
  $region12: #{basic_block_forward.3} parent=0 // pred_region
    _
  $region13: #{basic_block_forward.3} parent=0 // pred_fallthru
    _
  %v14 = vld [vmem:[%s0] sm:$0xff]
  %v15 = vld [vmem:[%s0 + $0x8] sm:$0xff]
  %v16 = vld [vmem:[%s0 + $0x10] sm:$0xff]
  %v17 = vld [vmem:[%s0 + $0x18] sm:$0xff]
  %v18 = vld [vmem:[%s0 + $0x20] sm:$0xff]
  %v19 = vld [vmem:[%s0 + $0x28] sm:$0xff]
  %v20 = vld [vmem:[%s0 + $0x30] sm:$0xff]
  %v21 = vld [vmem:[%s0 + $0x38] sm:$0xff]
  %v22 = vld [vmem:[%s0 + $0x40] sm:$0xff]
  %v23 = vld [vmem:[%s0 + $0x48] sm:$0xff]
  %v24 = vld [vmem:[%s0 + $0x50] sm:$0xff]
  %v25 = vld [vmem:[%s0 + $0x58] sm:$0xff]
  %v26 = vld [vmem:[%s0 + $0x60] sm:$0xff]
  %v27 = vld [vmem:[%s0 + $0x68] sm:$0xff]
  %v28 = vld [vmem:[%s0 + $0x70] sm:$0xff]
  %v29 = vld [vmem:[%s0 + $0x78] sm:$0xff]
  %v30 = vld [vmem:[%s0 + $0x80] sm:$0xff]
  %v31 = vld [vmem:[%s0 + $0x88] sm:$0xff]
  %v32 = vld [vmem:[%s0 + $0x90] sm:$0xff]
  %v33 = vld [vmem:[%s0 + $0x98] sm:$0xff]
  %v34 = vld [vmem:[%s0 + $0xa0] sm:$0xff]
  %v35 = vld [vmem:[%s0 + $0xa8] sm:$0xff]
  %v36 = vld [vmem:[%s0 + $0xb0] sm:$0xff]
  %v37 = vld [vmem:[%s0 + $0xb8] sm:$0xff]
  %v38 = vld [vmem:[%s0 + $0xc0] sm:$0xff]
  %v39 = vld [vmem:[%s0 + $0xc8] sm:$0xff]
  %v40 = vld [vmem:[%s0 + $0xd0] sm:$0xff]
  %v41 = vld [vmem:[%s0 + $0xd8] sm:$0xff]
  %v42 = vld [vmem:[%s0 + $0xe0] sm:$0xff]
  %v43 = vld [vmem:[%s0 + $0xe8] sm:$0xff]
  %v44 = vld [vmem:[%s0 + $0xf0] sm:$0xff]
  %v45 = vld [vmem:[%s0 + $0xf8] sm:$0xff]
  %v46 = vld [vmem:[%s0 + $0x100] sm:$0xff]
  %v47 = vld [vmem:[%s0 + $0x108] sm:$0xff]
  %v48 = vld [vmem:[%s0 + $0x110] sm:$0xff]
  %v49 = vld [vmem:[%s0 + $0x118] sm:$0xff]
  %v50 = vld [vmem:[%s0 + $0x120] sm:$0xff]
  %v51 = vld [vmem:[%s0 + $0x128] sm:$0xff]
  %v52 = vld [vmem:[%s0 + $0x130] sm:$0xff]
  %v53 = vld [vmem:[%s0 + $0x138] sm:$0xff]
  %v54 = vld [vmem:[%s0 + $0x140] sm:$0xff]
  %v55 = vld [vmem:[%s0 + $0x148] sm:$0xff]
  %v56 = vld [vmem:[%s0 + $0x150] sm:$0xff]
  %v57 = vld [vmem:[%s0 + $0x158] sm:$0xff]
  %v58 = vld [vmem:[%s0 + $0x160] sm:$0xff]
  %v59 = vld [vmem:[%s0 + $0x168] sm:$0xff]
  %v60 = vld [vmem:[%s0 + $0x170] sm:$0xff]
  %v61 = vld [vmem:[%s0 + $0x178] sm:$0xff]
  %v62 = vld [vmem:[%s0 + $0x180] sm:$0xff]
  %v63 = vld [vmem:[%s0 + $0x188] sm:$0xff]
  %v64 = vld [vmem:[%s0 + $0x190] sm:$0xff]
  %v65 = vld [vmem:[%s0 + $0x198] sm:$0xff]
  %v66 = vld [vmem:[%s0 + $0x1a0] sm:$0xff]
  %v67 = vld [vmem:[%s0 + $0x1a8] sm:$0xff]
  %v68 = vld [vmem:[%s0 + $0x1b0] sm:$0xff]
  %v69 = vld [vmem:[%s0 + $0x1b8] sm:$0xff]
  %v70 = vld [vmem:[%s0 + $0x1c0] sm:$0xff]
  %v71 = vld [vmem:[%s0 + $0x1c8] sm:$0xff]
  %v72 = vld [vmem:[%s0 + $0x1d0] sm:$0xff]
  %v73 = vld [vmem:[%s0 + $0x1d8] sm:$0xff]
  %v74 = vld [vmem:[%s0 + $0x1e0] sm:$0xff]
  %v75 = vld [vmem:[%s0 + $0x1e8] sm:$0xff]
  %v76 = vld [vmem:[%s0 + $0x1f0] sm:$0xff]
  %v77 = vld [vmem:[%s0 + $0x1f8] sm:$0xff]
  %v78 = vld [vmem:[%s1] sm:$0x1]
  %v80 = vperm.slane %v78, 0
  %v82 = vmul.f32 %v14, %v80
  %v83 = vmul.f32 %v15, %v80
  %v84 = vmul.f32 %v16, %v80
  %v85 = vmul.f32 %v17, %v80
  %v86 = vmul.f32 %v18, %v80
  %v87 = vmul.f32 %v19, %v80
  %v88 = vmul.f32 %v20, %v80
  %v89 = vmul.f32 %v21, %v80
  %v90 = vmul.f32 %v22, %v80
  %v91 = vmul.f32 %v23, %v80
  %v92 = vmul.f32 %v24, %v80
  %v93 = vmul.f32 %v25, %v80
  %v94 = vmul.f32 %v26, %v80
  %v95 = vmul.f32 %v27, %v80
  %v96 = vmul.f32 %v28, %v80
  %v97 = vmul.f32 %v29, %v80
  %v98 = vmul.f32 %v30, %v80
  %v99 = vmul.f32 %v31, %v80
  %v100 = vmul.f32 %v32, %v80
  %v101 = vmul.f32 %v33, %v80
  %v102 = vmul.f32 %v34, %v80
  %v103 = vmul.f32 %v35, %v80
  %v104 = vmul.f32 %v36, %v80
  %v105 = vmul.f32 %v37, %v80
  %v106 = vmul.f32 %v38, %v80
  %v107 = vmul.f32 %v39, %v80
  %v108 = vmul.f32 %v40, %v80
  %v109 = vmul.f32 %v41, %v80
  %v110 = vmul.f32 %v42, %v80
  %v111 = vmul.f32 %v43, %v80
  %v112 = vmul.f32 %v44, %v80
  %v113 = vmul.f32 %v45, %v80
  %v114 = vmul.f32 %v46, %v80
  %v115 = vmul.f32 %v47, %v80
  %v116 = vmul.f32 %v48, %v80
  %v117 = vmul.f32 %v49, %v80
  %v118 = vmul.f32 %v50, %v80
  %v119 = vmul.f32 %v51, %v80
  %v120 = vmul.f32 %v52, %v80
  %v121 = vmul.f32 %v53, %v80
  %v122 = vmul.f32 %v54, %v80
  %v123 = vmul.f32 %v55, %v80
  %v124 = vmul.f32 %v56, %v80
  %v125 = vmul.f32 %v57, %v80
  %v126 = vmul.f32 %v58, %v80
  %v127 = vmul.f32 %v59, %v80
  %v128 = vmul.f32 %v60, %v80
  %v129 = vmul.f32 %v61, %v80
  %v130 = vmul.f32 %v62, %v80
  %v131 = vmul.f32 %v63, %v80
  %v132 = vmul.f32 %v64, %v80
  %v133 = vmul.f32 %v65, %v80
  %v134 = vmul.f32 %v66, %v80
  %v135 = vmul.f32 %v67, %v80
  %v136 = vmul.f32 %v68, %v80
  %v137 = vmul.f32 %v69, %v80
  %v138 = vmul.f32 %v70, %v80
  %v139 = vmul.f32 %v71, %v80
  %v140 = vmul.f32 %v72, %v80
  %v141 = vmul.f32 %v73, %v80
  %v142 = vmul.f32 %v74, %v80
  %v143 = vmul.f32 %v75, %v80
  %v144 = vmul.f32 %v76, %v80
  %v145 = vmul.f32 %v77, %v80
  %v146 = vld [vmem:[%s2] sm:$0x1]
  %v148 = vperm.slane %v146, 0
  %v150 = vadd.f32 %v82, %v148
  %v151 = vadd.f32 %v83, %v148
  %v152 = vadd.f32 %v84, %v148
  %v153 = vadd.f32 %v85, %v148
  %v154 = vadd.f32 %v86, %v148
  %v155 = vadd.f32 %v87, %v148
  %v156 = vadd.f32 %v88, %v148
  %v157 = vadd.f32 %v89, %v148
  %v158 = vadd.f32 %v90, %v148
  %v159 = vadd.f32 %v91, %v148
  %v160 = vadd.f32 %v92, %v148
  %v161 = vadd.f32 %v93, %v148
  %v162 = vadd.f32 %v94, %v148
  %v163 = vadd.f32 %v95, %v148
  %v164 = vadd.f32 %v96, %v148
  %v165 = vadd.f32 %v97, %v148
  %v166 = vadd.f32 %v98, %v148
  %v167 = vadd.f32 %v99, %v148
  %v168 = vadd.f32 %v100, %v148
  %v169 = vadd.f32 %v101, %v148
  %v170 = vadd.f32 %v102, %v148
  %v171 = vadd.f32 %v103, %v148
  %v172 = vadd.f32 %v104, %v148
  %v173 = vadd.f32 %v105, %v148
  %v174 = vadd.f32 %v106, %v148
  %v175 = vadd.f32 %v107, %v148
  %v176 = vadd.f32 %v108, %v148
  %v177 = vadd.f32 %v109, %v148
  %v178 = vadd.f32 %v110, %v148
  %v179 = vadd.f32 %v111, %v148
  %v180 = vadd.f32 %v112, %v148
  %v181 = vadd.f32 %v113, %v148
  %v182 = vadd.f32 %v114, %v148
  %v183 = vadd.f32 %v115, %v148
  %v184 = vadd.f32 %v116, %v148
  %v185 = vadd.f32 %v117, %v148
  %v186 = vadd.f32 %v118, %v148
  %v187 = vadd.f32 %v119, %v148
  %v188 = vadd.f32 %v120, %v148
  %v189 = vadd.f32 %v121, %v148
  %v190 = vadd.f32 %v122, %v148
  %v191 = vadd.f32 %v123, %v148
  %v192 = vadd.f32 %v124, %v148
  %v193 = vadd.f32 %v125, %v148
  %v194 = vadd.f32 %v126, %v148
  %v195 = vadd.f32 %v127, %v148
  %v196 = vadd.f32 %v128, %v148
  %v197 = vadd.f32 %v129, %v148
  %v198 = vadd.f32 %v130, %v148
  %v199 = vadd.f32 %v131, %v148
  %v200 = vadd.f32 %v132, %v148
  %v201 = vadd.f32 %v133, %v148
  %v202 = vadd.f32 %v134, %v148
  %v203 = vadd.f32 %v135, %v148
  %v204 = vadd.f32 %v136, %v148
  %v205 = vadd.f32 %v137, %v148
  %v206 = vadd.f32 %v138, %v148
  %v207 = vadd.f32 %v139, %v148
  %v208 = vadd.f32 %v140, %v148
  %v209 = vadd.f32 %v141, %v148
  %v210 = vadd.f32 %v142, %v148
  %v211 = vadd.f32 %v143, %v148
  %v212 = vadd.f32 %v144, %v148
  %v213 = vadd.f32 %v145, %v148
  %v214 = vmax.f32 %v150, 0.0
  %v215 = vmax.f32 %v151, 0.0
  %v216 = vmax.f32 %v152, 0.0
  %v217 = vmax.f32 %v153, 0.0
  %v218 = vmax.f32 %v154, 0.0
  %v219 = vmax.f32 %v155, 0.0
  %v220 = vmax.f32 %v156, 0.0
  %v221 = vmax.f32 %v157, 0.0
  %v222 = vmax.f32 %v158, 0.0
  %v223 = vmax.f32 %v159, 0.0
  %v224 = vmax.f32 %v160, 0.0
  %v225 = vmax.f32 %v161, 0.0
  %v226 = vmax.f32 %v162, 0.0
  %v227 = vmax.f32 %v163, 0.0
  %v228 = vmax.f32 %v164, 0.0
  %v229 = vmax.f32 %v165, 0.0
  %v230 = vmax.f32 %v166, 0.0
  %v231 = vmax.f32 %v167, 0.0
  %v232 = vmax.f32 %v168, 0.0
  %v233 = vmax.f32 %v169, 0.0
  %v234 = vmax.f32 %v170, 0.0
  %v235 = vmax.f32 %v171, 0.0
  %v236 = vmax.f32 %v172, 0.0
  %v237 = vmax.f32 %v173, 0.0
  %v238 = vmax.f32 %v174, 0.0
  %v239 = vmax.f32 %v175, 0.0
  %v240 = vmax.f32 %v176, 0.0
  %v241 = vmax.f32 %v177, 0.0
  %v242 = vmax.f32 %v178, 0.0
  %v243 = vmax.f32 %v179, 0.0
  %v244 = vmax.f32 %v180, 0.0
  %v245 = vmax.f32 %v181, 0.0
  %v246 = vmax.f32 %v182, 0.0
  %v247 = vmax.f32 %v183, 0.0
  %v248 = vmax.f32 %v184, 0.0
  %v249 = vmax.f32 %v185, 0.0
  %v250 = vmax.f32 %v186, 0.0
  %v251 = vmax.f32 %v187, 0.0
  %v252 = vmax.f32 %v188, 0.0
  %v253 = vmax.f32 %v189, 0.0
  %v254 = vmax.f32 %v190, 0.0
  %v255 = vmax.f32 %v191, 0.0
  %v256 = vmax.f32 %v192, 0.0
  %v257 = vmax.f32 %v193, 0.0
  %v258 = vmax.f32 %v194, 0.0
  %v259 = vmax.f32 %v195, 0.0
  %v260 = vmax.f32 %v196, 0.0
  %v261 = vmax.f32 %v197, 0.0
  %v262 = vmax.f32 %v198, 0.0
  %v263 = vmax.f32 %v199, 0.0
  %v264 = vmax.f32 %v200, 0.0
  %v265 = vmax.f32 %v201, 0.0
  %v266 = vmax.f32 %v202, 0.0
  %v267 = vmax.f32 %v203, 0.0
  %v268 = vmax.f32 %v204, 0.0
  %v269 = vmax.f32 %v205, 0.0
  %v270 = vmax.f32 %v206, 0.0
  %v271 = vmax.f32 %v207, 0.0
  %v272 = vmax.f32 %v208, 0.0
  %v273 = vmax.f32 %v209, 0.0
  %v274 = vmax.f32 %v210, 0.0
  %v275 = vmax.f32 %v211, 0.0
  %v276 = vmax.f32 %v212, 0.0
  %v277 = vmax.f32 %v213, 0.0
  %v278 = vpack.c.bf16 %v214, %v214
  %v279 = vpack.c.bf16 %v215, %v215
  %v280 = vpack.c.bf16 %v216, %v216
  %v281 = vpack.c.bf16 %v217, %v217
  %v282 = vpack.c.bf16 %v218, %v218
  %v283 = vpack.c.bf16 %v219, %v219
  %v284 = vpack.c.bf16 %v220, %v220
  %v285 = vpack.c.bf16 %v221, %v221
  %v286 = vpack.c.bf16 %v222, %v222
  %v287 = vpack.c.bf16 %v223, %v223
  %v288 = vpack.c.bf16 %v224, %v224
  %v289 = vpack.c.bf16 %v225, %v225
  %v290 = vpack.c.bf16 %v226, %v226
  %v291 = vpack.c.bf16 %v227, %v227
  %v292 = vpack.c.bf16 %v228, %v228
  %v293 = vpack.c.bf16 %v229, %v229
  %v294 = vpack.c.bf16 %v230, %v230
  %v295 = vpack.c.bf16 %v231, %v231
  %v296 = vpack.c.bf16 %v232, %v232
  %v297 = vpack.c.bf16 %v233, %v233
  %v298 = vpack.c.bf16 %v234, %v234
  %v299 = vpack.c.bf16 %v235, %v235
  %v300 = vpack.c.bf16 %v236, %v236
  %v301 = vpack.c.bf16 %v237, %v237
  %v302 = vpack.c.bf16 %v238, %v238
  %v303 = vpack.c.bf16 %v239, %v239
  %v304 = vpack.c.bf16 %v240, %v240
  %v305 = vpack.c.bf16 %v241, %v241
  %v306 = vpack.c.bf16 %v242, %v242
  %v307 = vpack.c.bf16 %v243, %v243
  %v308 = vpack.c.bf16 %v244, %v244
  %v309 = vpack.c.bf16 %v245, %v245
  %v310 = vpack.c.bf16 %v246, %v246
  %v311 = vpack.c.bf16 %v247, %v247
  %v312 = vpack.c.bf16 %v248, %v248
  %v313 = vpack.c.bf16 %v249, %v249
  %v314 = vpack.c.bf16 %v250, %v250
  %v315 = vpack.c.bf16 %v251, %v251
  %v316 = vpack.c.bf16 %v252, %v252
  %v317 = vpack.c.bf16 %v253, %v253
  %v318 = vpack.c.bf16 %v254, %v254
  %v319 = vpack.c.bf16 %v255, %v255
  %v320 = vpack.c.bf16 %v256, %v256
  %v321 = vpack.c.bf16 %v257, %v257
  %v322 = vpack.c.bf16 %v258, %v258
  %v323 = vpack.c.bf16 %v259, %v259
  %v324 = vpack.c.bf16 %v260, %v260
  %v325 = vpack.c.bf16 %v261, %v261
  %v326 = vpack.c.bf16 %v262, %v262
  %v327 = vpack.c.bf16 %v263, %v263
  %v328 = vpack.c.bf16 %v264, %v264
  %v329 = vpack.c.bf16 %v265, %v265
  %v330 = vpack.c.bf16 %v266, %v266
  %v331 = vpack.c.bf16 %v267, %v267
  %v332 = vpack.c.bf16 %v268, %v268
  %v333 = vpack.c.bf16 %v269, %v269
  %v334 = vpack.c.bf16 %v270, %v270
  %v335 = vpack.c.bf16 %v271, %v271
  %v336 = vpack.c.bf16 %v272, %v272
  %v337 = vpack.c.bf16 %v273, %v273
  %v338 = vpack.c.bf16 %v274, %v274
  %v339 = vpack.c.bf16 %v275, %v275
  %v340 = vpack.c.bf16 %v276, %v276
  %v341 = vpack.c.bf16 %v277, %v277
  %vm342 = vcmask 27648
  %343 = vst.msk [vmem:[%s3] sm:$0xf] %vm342, %v278
  %344 = vst.msk [vmem:[%s3 + $0x4] sm:$0xf] %vm342, %v279
  %345 = vst.msk [vmem:[%s3 + $0x8] sm:$0xf] %vm342, %v280
  %346 = vst.msk [vmem:[%s3 + $0xc] sm:$0xf] %vm342, %v281
  %347 = vst.msk [vmem:[%s3 + $0x10] sm:$0xf] %vm342, %v282
  %348 = vst.msk [vmem:[%s3 + $0x14] sm:$0xf] %vm342, %v283
  %349 = vst.msk [vmem:[%s3 + $0x18] sm:$0xf] %vm342, %v284
  %350 = vst.msk [vmem:[%s3 + $0x1c] sm:$0xf] %vm342, %v285
  %351 = vst.msk [vmem:[%s3 + $0x20] sm:$0xf] %vm342, %v286
  %352 = vst.msk [vmem:[%s3 + $0x24] sm:$0xf] %vm342, %v287
  %353 = vst.msk [vmem:[%s3 + $0x28] sm:$0xf] %vm342, %v288
  %354 = vst.msk [vmem:[%s3 + $0x2c] sm:$0xf] %vm342, %v289
  %355 = vst.msk [vmem:[%s3 + $0x30] sm:$0xf] %vm342, %v290
  %356 = vst.msk [vmem:[%s3 + $0x34] sm:$0xf] %vm342, %v291
  %357 = vst.msk [vmem:[%s3 + $0x38] sm:$0xf] %vm342, %v292
  %358 = vst.msk [vmem:[%s3 + $0x3c] sm:$0xf] %vm342, %v293
  %359 = vst.msk [vmem:[%s3 + $0x40] sm:$0xf] %vm342, %v294
  %360 = vst.msk [vmem:[%s3 + $0x44] sm:$0xf] %vm342, %v295
  %361 = vst.msk [vmem:[%s3 + $0x48] sm:$0xf] %vm342, %v296
  %362 = vst.msk [vmem:[%s3 + $0x4c] sm:$0xf] %vm342, %v297
  %363 = vst.msk [vmem:[%s3 + $0x50] sm:$0xf] %vm342, %v298
  %364 = vst.msk [vmem:[%s3 + $0x54] sm:$0xf] %vm342, %v299
  %365 = vst.msk [vmem:[%s3 + $0x58] sm:$0xf] %vm342, %v300
  %366 = vst.msk [vmem:[%s3 + $0x5c] sm:$0xf] %vm342, %v301
  %367 = vst.msk [vmem:[%s3 + $0x60] sm:$0xf] %vm342, %v302
  %368 = vst.msk [vmem:[%s3 + $0x64] sm:$0xf] %vm342, %v303
  %369 = vst.msk [vmem:[%s3 + $0x68] sm:$0xf] %vm342, %v304
  %370 = vst.msk [vmem:[%s3 + $0x6c] sm:$0xf] %vm342, %v305
  %371 = vst.msk [vmem:[%s3 + $0x70] sm:$0xf] %vm342, %v306
  %372 = vst.msk [vmem:[%s3 + $0x74] sm:$0xf] %vm342, %v307
  %373 = vst.msk [vmem:[%s3 + $0x78] sm:$0xf] %vm342, %v308
  %374 = vst.msk [vmem:[%s3 + $0x7c] sm:$0xf] %vm342, %v309
  %375 = vst.msk [vmem:[%s3 + $0x80] sm:$0xf] %vm342, %v310
  %376 = vst.msk [vmem:[%s3 + $0x84] sm:$0xf] %vm342, %v311
  %377 = vst.msk [vmem:[%s3 + $0x88] sm:$0xf] %vm342, %v312
  %378 = vst.msk [vmem:[%s3 + $0x8c] sm:$0xf] %vm342, %v313
  %379 = vst.msk [vmem:[%s3 + $0x90] sm:$0xf] %vm342, %v314
  %380 = vst.msk [vmem:[%s3 + $0x94] sm:$0xf] %vm342, %v315
  %381 = vst.msk [vmem:[%s3 + $0x98] sm:$0xf] %vm342, %v316
  %382 = vst.msk [vmem:[%s3 + $0x9c] sm:$0xf] %vm342, %v317
  %383 = vst.msk [vmem:[%s3 + $0xa0] sm:$0xf] %vm342, %v318
  %384 = vst.msk [vmem:[%s3 + $0xa4] sm:$0xf] %vm342, %v319
  %385 = vst.msk [vmem:[%s3 + $0xa8] sm:$0xf] %vm342, %v320
  %386 = vst.msk [vmem:[%s3 + $0xac] sm:$0xf] %vm342, %v321
  %387 = vst.msk [vmem:[%s3 + $0xb0] sm:$0xf] %vm342, %v322
  %388 = vst.msk [vmem:[%s3 + $0xb4] sm:$0xf] %vm342, %v323
  %389 = vst.msk [vmem:[%s3 + $0xb8] sm:$0xf] %vm342, %v324
  %390 = vst.msk [vmem:[%s3 + $0xbc] sm:$0xf] %vm342, %v325
  %391 = vst.msk [vmem:[%s3 + $0xc0] sm:$0xf] %vm342, %v326
  %392 = vst.msk [vmem:[%s3 + $0xc4] sm:$0xf] %vm342, %v327
  %393 = vst.msk [vmem:[%s3 + $0xc8] sm:$0xf] %vm342, %v328
  %394 = vst.msk [vmem:[%s3 + $0xcc] sm:$0xf] %vm342, %v329
  %395 = vst.msk [vmem:[%s3 + $0xd0] sm:$0xf] %vm342, %v330
  %396 = vst.msk [vmem:[%s3 + $0xd4] sm:$0xf] %vm342, %v331
  %397 = vst.msk [vmem:[%s3 + $0xd8] sm:$0xf] %vm342, %v332
  %398 = vst.msk [vmem:[%s3 + $0xdc] sm:$0xf] %vm342, %v333
  %399 = vst.msk [vmem:[%s3 + $0xe0] sm:$0xf] %vm342, %v334
  %400 = vst.msk [vmem:[%s3 + $0xe4] sm:$0xf] %vm342, %v335
  %401 = vst.msk [vmem:[%s3 + $0xe8] sm:$0xf] %vm342, %v336
  %402 = vst.msk [vmem:[%s3 + $0xec] sm:$0xf] %vm342, %v337
  %403 = vst.msk [vmem:[%s3 + $0xf0] sm:$0xf] %vm342, %v338
  %404 = vst.msk [vmem:[%s3 + $0xf4] sm:$0xf] %vm342, %v339
  %405 = vst.msk [vmem:[%s3 + $0xf8] sm:$0xf] %vm342, %v340
  %406 = vst.msk [vmem:[%s3 + $0xfc] sm:$0xf] %vm342, %v341
  // Predicated region
  $region14: #{basic_block_forward.3} parent=0 // pred_check
    _
  $region15: #{basic_block_forward.3} parent=0 // pred_check_branch
    %408 = sbr.rel (0) target = $region17
  $region16: #{basic_block_forward.3} parent=0 // pred_region
    _
  $region17: #{basic_block_forward.3} parent=0 // pred_fallthru
    _
  // Predicated region
  $region18: #{basic_block_forward.3} parent=0 // pred_check
    _
  $region19: #{basic_block_forward.3} parent=0 // pred_check_branch
    %410 = sbr.rel (0) target = $region21
  $region20: #{basic_block_forward.3} parent=0 // pred_region
    _
  $region21: #{basic_block_forward.3} parent=0 // pred_fallthru
    _

// kernel: basic_block_forward.4
$region0: #{basic_block_forward.4}
  #allocation0 [shape = 'u32[]', space=smem, size = 0x4, offset = 0x4, fixed_abs, tag = 'smem constant byte address 0x4 - core index']
  #allocation1 [shape = 'u32[72,128]{1,0:T(1,128)}', space=vmem, size = 0x9000, scoped, tag = 'internal scratch']
  #allocation2 [shape = 'f32[128,128]{1,0:T(8,128)}', space=vmem, size = 0x10000, scoped, tag = 'scratch operand']
  %s0 = inlined_call_operand.vmem [shape: bf16[128,128], index: 0, kind: input, shape index: {}]
  %s1 = inlined_call_operand.vmem [shape: bf16[128,128], index: 1, kind: input, shape index: {}]
  %s2 = inlined_call_operand.vmem [shape: f32[1,128], index: 2, kind: input, shape index: {}]
  %s3 = inlined_call_operand.vmem [shape: f32[1,128], index: 3, kind: input, shape index: {}]
  %s4 = inlined_call_operand.vmem [shape: bf16[128,128], index: 4, kind: output, shape index: {}]
  %s5 = sld [smem:[#allocation0]]
  $region34: #{basic_block_forward.4} parent=0
    _
  %s7 = ssub.s32 1, %s5
  %s8 = scalar_select 0, %s7, %s5
  // Predicated region
  $region2: #{basic_block_forward.4} parent=0 // pred_check
    _
  $region3: #{basic_block_forward.4} parent=0 // pred_check_branch
    %10 = sbr.rel (0) target = $region5
  $region4: #{basic_block_forward.4} parent=0 // pred_region
    _
  $region5: #{basic_block_forward.4} parent=0 // pred_fallthru
    _
  // Predicated region
  $region6: #{basic_block_forward.4} parent=0 // pred_check
    _
  $region7: #{basic_block_forward.4} parent=0 // pred_check_branch
    %12 = sbr.rel (0) target = $region9
  $region8: #{basic_block_forward.4} parent=0 // pred_region
    _
  $region9: #{basic_block_forward.4} parent=0 // pred_fallthru
    _
  // Predicated region
  $region10: #{basic_block_forward.4} parent=0 // pred_check
    _
  $region11: #{basic_block_forward.4} parent=0 // pred_check_branch
    %14 = sbr.rel (0) target = $region13
  $region12: #{basic_block_forward.4} parent=0 // pred_region
    _
  $region13: #{basic_block_forward.4} parent=0 // pred_fallthru
    _
  // Predicated region
  $region14: #{basic_block_forward.4} parent=0 // pred_check
    _
  $region15: #{basic_block_forward.4} parent=0 // pred_check_branch
    %16 = sbr.rel (0) target = $region17
  $region16: #{basic_block_forward.4} parent=0 // pred_region
    _
  $region17: #{basic_block_forward.4} parent=0 // pred_fallthru
    _
  %p17 = scmp.eq.s32.totalorder 0, 0
  // Predicated region
  $region18: #{basic_block_forward.4} parent=0 // pred_check
    %p18 = pneg %p17
  $region19: #{basic_block_forward.4} parent=0 // pred_check_branch
    %20 = sbr.rel (%p18) target = $region21
  $region20: #{basic_block_forward.4} parent=0 // pred_region
    %21 = vst [vmem:[#allocation2] sm:$0xff] 0.0
    %22 = vst [vmem:[#allocation2 + $0x8] sm:$0xff] 0.0
    %23 = vst [vmem:[#allocation2 + $0x10] sm:$0xff] 0.0
    %24 = vst [vmem:[#allocation2 + $0x18] sm:$0xff] 0.0
    %25 = vst [vmem:[#allocation2 + $0x20] sm:$0xff] 0.0
    %26 = vst [vmem:[#allocation2 + $0x28] sm:$0xff] 0.0
    %27 = vst [vmem:[#allocation2 + $0x30] sm:$0xff] 0.0
    %28 = vst [vmem:[#allocation2 + $0x38] sm:$0xff] 0.0
    %29 = vst [vmem:[#allocation2 + $0x40] sm:$0xff] 0.0
    %30 = vst [vmem:[#allocation2 + $0x48] sm:$0xff] 0.0
    %31 = vst [vmem:[#allocation2 + $0x50] sm:$0xff] 0.0
    %32 = vst [vmem:[#allocation2 + $0x58] sm:$0xff] 0.0
    %33 = vst [vmem:[#allocation2 + $0x60] sm:$0xff] 0.0
    %34 = vst [vmem:[#allocation2 + $0x68] sm:$0xff] 0.0
    %35 = vst [vmem:[#allocation2 + $0x70] sm:$0xff] 0.0
    %36 = vst [vmem:[#allocation2 + $0x78] sm:$0xff] 0.0
  $region21: #{basic_block_forward.4} parent=0 // pred_fallthru
    _
  %v37 = vld [vmem:[#allocation2] sm:$0xff]
  %v38 = vld [vmem:[#allocation2 + $0x8] sm:$0xff]
  %v39 = vld [vmem:[#allocation2 + $0x10] sm:$0xff]
  %v40 = vld [vmem:[#allocation2 + $0x18] sm:$0xff]
  %v41 = vld [vmem:[#allocation2 + $0x20] sm:$0xff]
  %v42 = vld [vmem:[#allocation2 + $0x28] sm:$0xff]
  %v43 = vld [vmem:[#allocation2 + $0x30] sm:$0xff]
  %v44 = vld [vmem:[#allocation2 + $0x38] sm:$0xff]
  %v45 = vld [vmem:[#allocation2 + $0x40] sm:$0xff]
  %v46 = vld [vmem:[#allocation2 + $0x48] sm:$0xff]
  %v47 = vld [vmem:[#allocation2 + $0x50] sm:$0xff]
  %v48 = vld [vmem:[#allocation2 + $0x58] sm:$0xff]
  %v49 = vld [vmem:[#allocation2 + $0x60] sm:$0xff]
  %v50 = vld [vmem:[#allocation2 + $0x68] sm:$0xff]
  %v51 = vld [vmem:[#allocation2 + $0x70] sm:$0xff]
  %v52 = vld [vmem:[#allocation2 + $0x78] sm:$0xff]
  %v53 = vld [vmem:[%s0] sm:$0xf]
  %v54 = vld [vmem:[%s0 + $0x4] sm:$0xf]
  %v55 = vld [vmem:[%s0 + $0x8] sm:$0xf]
  %v56 = vld [vmem:[%s0 + $0xc] sm:$0xf]
  %v57 = vld [vmem:[%s0 + $0x10] sm:$0xf]
  %v58 = vld [vmem:[%s0 + $0x14] sm:$0xf]
  %v59 = vld [vmem:[%s0 + $0x18] sm:$0xf]
  %v60 = vld [vmem:[%s0 + $0x1c] sm:$0xf]
  %v61 = vld [vmem:[%s0 + $0x20] sm:$0xf]
  %v62 = vld [vmem:[%s0 + $0x24] sm:$0xf]
  %v63 = vld [vmem:[%s0 + $0x28] sm:$0xf]
  %v64 = vld [vmem:[%s0 + $0x2c] sm:$0xf]
  %v65 = vld [vmem:[%s0 + $0x30] sm:$0xf]
  %v66 = vld [vmem:[%s0 + $0x34] sm:$0xf]
  %v67 = vld [vmem:[%s0 + $0x38] sm:$0xf]
  %v68 = vld [vmem:[%s0 + $0x3c] sm:$0xf]
  %v69 = vld [vmem:[%s1] sm:$0xf]
  %v70 = vld [vmem:[%s1 + $0x4] sm:$0xf]
  %v71 = vld [vmem:[%s1 + $0x8] sm:$0xf]
  %v72 = vld [vmem:[%s1 + $0xc] sm:$0xf]
  %v73 = vld [vmem:[%s1 + $0x10] sm:$0xf]
  %v74 = vld [vmem:[%s1 + $0x14] sm:$0xf]
  %v75 = vld [vmem:[%s1 + $0x18] sm:$0xf]
  %v76 = vld [vmem:[%s1 + $0x1c] sm:$0xf]
  %v77 = vld [vmem:[%s1 + $0x20] sm:$0xf]
  %v78 = vld [vmem:[%s1 + $0x24] sm:$0xf]
  %v79 = vld [vmem:[%s1 + $0x28] sm:$0xf]
  %v80 = vld [vmem:[%s1 + $0x2c] sm:$0xf]
  %v81 = vld [vmem:[%s1 + $0x30] sm:$0xf]
  %v82 = vld [vmem:[%s1 + $0x34] sm:$0xf]
  %v83 = vld [vmem:[%s1 + $0x38] sm:$0xf]
  %v84 = vld [vmem:[%s1 + $0x3c] sm:$0xf]
  %v101 = vunpack.c.l.b16 %v53
  %v102 = vunpack.c.l.b16 %v54
  %v103 = vunpack.c.l.b16 %v55
  %v104 = vunpack.c.l.b16 %v56
  %v105 = vunpack.c.l.b16 %v57
  %v106 = vunpack.c.l.b16 %v58
  %v107 = vunpack.c.l.b16 %v59
  %v108 = vunpack.c.l.b16 %v60
  %v109 = vunpack.c.l.b16 %v61
  %v110 = vunpack.c.l.b16 %v62
  %v111 = vunpack.c.l.b16 %v63
  %v112 = vunpack.c.l.b16 %v64
  %v113 = vunpack.c.l.b16 %v65
  %v114 = vunpack.c.l.b16 %v66
  %v115 = vunpack.c.l.b16 %v67
  %v116 = vunpack.c.l.b16 %v68
  %v117 = vpack.c.b16 %v102, %v101
  %v118 = vpack.c.b16 %v104, %v103
  %v119 = vpack.c.b16 %v106, %v105
  %v120 = vpack.c.b16 %v108, %v107
  %v121 = vpack.c.b16 %v110, %v109
  %v122 = vpack.c.b16 %v112, %v111
  %v123 = vpack.c.b16 %v114, %v113
  %v124 = vpack.c.b16 %v116, %v115
  %v149 = vunpack.c.l.b16 %v69
  %v150 = vunpack.c.l.b16 %v70
  %v151 = vunpack.c.l.b16 %v71
  %v152 = vunpack.c.l.b16 %v72
  %v153 = vunpack.c.l.b16 %v73
  %v154 = vunpack.c.l.b16 %v74
  %v155 = vunpack.c.l.b16 %v75
  %v156 = vunpack.c.l.b16 %v76
  %v157 = vunpack.c.l.b16 %v77
  %v158 = vunpack.c.l.b16 %v78
  %v159 = vunpack.c.l.b16 %v79
  %v160 = vunpack.c.l.b16 %v80
  %v161 = vunpack.c.l.b16 %v81
  %v162 = vunpack.c.l.b16 %v82
  %v163 = vunpack.c.l.b16 %v83
  %v164 = vunpack.c.l.b16 %v84
  %v165 = vpack.c.b16 %v150, %v149
  %v166 = vpack.c.b16 %v152, %v151
  %v167 = vpack.c.b16 %v154, %v153
  %v168 = vpack.c.b16 %v156, %v155
  %v169 = vpack.c.b16 %v158, %v157
  %v170 = vpack.c.b16 %v160, %v159
  %v171 = vpack.c.b16 %v162, %v161
  %v172 = vpack.c.b16 %v164, %v163
  %181 = vmatpush.bf16.msra.mxu0 %v172
  %182 = vmatpush.bf16.msra.mxu0 %v171
  %183 = vmatpush.bf16.msra.mxu0 %v170
  %184 = vmatpush.bf16.msra.mxu0 %v169
  %185 = vmatpush.bf16.msra.mxu0 %v168
  %186 = vmatpush.bf16.msra.mxu0 %v167
  %187 = vmatpush.bf16.msra.mxu0 %v166
  %188 = vmatpush.bf16.msra.mxu0 %v165
  %189 = vmatmul.bf16.gmra.mxu0 %v117
  %v190 = vpop.f32.mrf.mxu0
  %v191 = vadd.f32 0.0, %v190
  %v192 = vpop.f32.mrf.mxu0
  %v193 = vadd.f32 0.0, %v192
  %194 = vmatmul.bf16.gmra.mxu0 %v118
  %v195 = vpop.f32.mrf.mxu0
  %v196 = vadd.f32 0.0, %v195
  %v197 = vpop.f32.mrf.mxu0
  %v198 = vadd.f32 0.0, %v197
  %199 = vmatmul.bf16.gmra.mxu0 %v119
  %v200 = vpop.f32.mrf.mxu0
  %v201 = vadd.f32 0.0, %v200
  %v202 = vpop.f32.mrf.mxu0
  %v203 = vadd.f32 0.0, %v202
  %204 = vmatmul.bf16.gmra.mxu0 %v120
  %v205 = vpop.f32.mrf.mxu0
  %v206 = vadd.f32 0.0, %v205
  %v207 = vpop.f32.mrf.mxu0
  %v208 = vadd.f32 0.0, %v207
  %209 = vmatmul.bf16.gmra.mxu0 %v121
  %v210 = vpop.f32.mrf.mxu0
  %v211 = vadd.f32 0.0, %v210
  %v212 = vpop.f32.mrf.mxu0
  %v213 = vadd.f32 0.0, %v212
  %214 = vmatmul.bf16.gmra.mxu0 %v122
  %v215 = vpop.f32.mrf.mxu0
  %v216 = vadd.f32 0.0, %v215
  %v217 = vpop.f32.mrf.mxu0
  %v218 = vadd.f32 0.0, %v217
  %219 = vmatmul.bf16.gmra.mxu0 %v123
  %v220 = vpop.f32.mrf.mxu0
  %v221 = vadd.f32 0.0, %v220
  %v222 = vpop.f32.mrf.mxu0
  %v223 = vadd.f32 0.0, %v222
  %224 = vmatmul.bf16.gmra.mxu0 %v124
  %v225 = vpop.f32.mrf.mxu0
  %v226 = vadd.f32 0.0, %v225
  %v227 = vpop.f32.mrf.mxu0
  %v228 = vadd.f32 0.0, %v227
  %229 = vdwg.mxu0
  %v230 = vadd.f32 %v37, %v191
  %v231 = vadd.f32 %v38, %v193
  %v232 = vadd.f32 %v39, %v196
  %v233 = vadd.f32 %v40, %v198
  %v234 = vadd.f32 %v41, %v201
  %v235 = vadd.f32 %v42, %v203
  %v236 = vadd.f32 %v43, %v206
  %v237 = vadd.f32 %v44, %v208
  %v238 = vadd.f32 %v45, %v211
  %v239 = vadd.f32 %v46, %v213
  %v240 = vadd.f32 %v47, %v216
  %v241 = vadd.f32 %v48, %v218
  %v242 = vadd.f32 %v49, %v221
  %v243 = vadd.f32 %v50, %v223
  %v244 = vadd.f32 %v51, %v226
  %v245 = vadd.f32 %v52, %v228
  %246 = vst [vmem:[#allocation2] sm:$0xff] %v230
  %247 = vst [vmem:[#allocation2 + $0x8] sm:$0xff] %v231
  %248 = vst [vmem:[#allocation2 + $0x10] sm:$0xff] %v232
  %249 = vst [vmem:[#allocation2 + $0x18] sm:$0xff] %v233
  %250 = vst [vmem:[#allocation2 + $0x20] sm:$0xff] %v234
  %251 = vst [vmem:[#allocation2 + $0x28] sm:$0xff] %v235
  %252 = vst [vmem:[#allocation2 + $0x30] sm:$0xff] %v236
  %253 = vst [vmem:[#allocation2 + $0x38] sm:$0xff] %v237
  %254 = vst [vmem:[#allocation2 + $0x40] sm:$0xff] %v238
  %255 = vst [vmem:[#allocation2 + $0x48] sm:$0xff] %v239
  %256 = vst [vmem:[#allocation2 + $0x50] sm:$0xff] %v240
  %257 = vst [vmem:[#allocation2 + $0x58] sm:$0xff] %v241
  %258 = vst [vmem:[#allocation2 + $0x60] sm:$0xff] %v242
  %259 = vst [vmem:[#allocation2 + $0x68] sm:$0xff] %v243
  %260 = vst [vmem:[#allocation2 + $0x70] sm:$0xff] %v244
  %261 = vst [vmem:[#allocation2 + $0x78] sm:$0xff] %v245
  // Predicated region
  $region22: #{basic_block_forward.4} parent=0 // pred_check
    %p262 = pneg %p17
  $region23: #{basic_block_forward.4} parent=0 // pred_check_branch
    %264 = sbr.rel (%p262) target = $region25
  $region24: #{basic_block_forward.4} parent=0 // pred_region
    %v265 = vld [vmem:[#allocation2] sm:$0xff]
    %v266 = vld [vmem:[#allocation2 + $0x8] sm:$0xff]
    %v267 = vld [vmem:[#allocation2 + $0x10] sm:$0xff]
    %v268 = vld [vmem:[#allocation2 + $0x18] sm:$0xff]
    %v269 = vld [vmem:[#allocation2 + $0x20] sm:$0xff]
    %v270 = vld [vmem:[#allocation2 + $0x28] sm:$0xff]
    %v271 = vld [vmem:[#allocation2 + $0x30] sm:$0xff]
    %v272 = vld [vmem:[#allocation2 + $0x38] sm:$0xff]
    %v273 = vld [vmem:[#allocation2 + $0x40] sm:$0xff]
    %v274 = vld [vmem:[#allocation2 + $0x48] sm:$0xff]
    %v275 = vld [vmem:[#allocation2 + $0x50] sm:$0xff]
    %v276 = vld [vmem:[#allocation2 + $0x58] sm:$0xff]
    %v277 = vld [vmem:[#allocation2 + $0x60] sm:$0xff]
    %v278 = vld [vmem:[#allocation2 + $0x68] sm:$0xff]
    %v279 = vld [vmem:[#allocation2 + $0x70] sm:$0xff]
    %v280 = vld [vmem:[#allocation2 + $0x78] sm:$0xff]
    %v281 = vld [vmem:[%s2] sm:$0x1]
    %v283 = vperm.slane %v281, 0
    %v285 = vmul.f32 %v265, %v283
    %v286 = vmul.f32 %v266, %v283
    %v287 = vmul.f32 %v267, %v283
    %v288 = vmul.f32 %v268, %v283
    %v289 = vmul.f32 %v269, %v283
    %v290 = vmul.f32 %v270, %v283
    %v291 = vmul.f32 %v271, %v283
    %v292 = vmul.f32 %v272, %v283
    %v293 = vmul.f32 %v273, %v283
    %v294 = vmul.f32 %v274, %v283
    %v295 = vmul.f32 %v275, %v283
    %v296 = vmul.f32 %v276, %v283
    %v297 = vmul.f32 %v277, %v283
    %v298 = vmul.f32 %v278, %v283
    %v299 = vmul.f32 %v279, %v283
    %v300 = vmul.f32 %v280, %v283
    %v301 = vld [vmem:[%s3] sm:$0x1]
    %v303 = vperm.slane %v301, 0
    %v305 = vadd.f32 %v285, %v303
    %v306 = vadd.f32 %v286, %v303
    %v307 = vadd.f32 %v287, %v303
    %v308 = vadd.f32 %v288, %v303
    %v309 = vadd.f32 %v289, %v303
    %v310 = vadd.f32 %v290, %v303
    %v311 = vadd.f32 %v291, %v303
    %v312 = vadd.f32 %v292, %v303
    %v313 = vadd.f32 %v293, %v303
    %v314 = vadd.f32 %v294, %v303
    %v315 = vadd.f32 %v295, %v303
    %v316 = vadd.f32 %v296, %v303
    %v317 = vadd.f32 %v297, %v303
    %v318 = vadd.f32 %v298, %v303
    %v319 = vadd.f32 %v299, %v303
    %v320 = vadd.f32 %v300, %v303
    %v321 = vmax.f32 %v305, 0.0
    %v322 = vmax.f32 %v306, 0.0
    %v323 = vmax.f32 %v307, 0.0
    %v324 = vmax.f32 %v308, 0.0
    %v325 = vmax.f32 %v309, 0.0
    %v326 = vmax.f32 %v310, 0.0
    %v327 = vmax.f32 %v311, 0.0
    %v328 = vmax.f32 %v312, 0.0
    %v329 = vmax.f32 %v313, 0.0
    %v330 = vmax.f32 %v314, 0.0
    %v331 = vmax.f32 %v315, 0.0
    %v332 = vmax.f32 %v316, 0.0
    %v333 = vmax.f32 %v317, 0.0
    %v334 = vmax.f32 %v318, 0.0
    %v335 = vmax.f32 %v319, 0.0
    %v336 = vmax.f32 %v320, 0.0
    %v337 = vpack.c.bf16 %v321, %v321
    %v338 = vpack.c.bf16 %v322, %v322
    %v339 = vpack.c.bf16 %v323, %v323
    %v340 = vpack.c.bf16 %v324, %v324
    %v341 = vpack.c.bf16 %v325, %v325
    %v342 = vpack.c.bf16 %v326, %v326
    %v343 = vpack.c.bf16 %v327, %v327
    %v344 = vpack.c.bf16 %v328, %v328
    %v345 = vpack.c.bf16 %v329, %v329
    %v346 = vpack.c.bf16 %v330, %v330
    %v347 = vpack.c.bf16 %v331, %v331
    %v348 = vpack.c.bf16 %v332, %v332
    %v349 = vpack.c.bf16 %v333, %v333
    %v350 = vpack.c.bf16 %v334, %v334
    %v351 = vpack.c.bf16 %v335, %v335
    %v352 = vpack.c.bf16 %v336, %v336
    %353 = vst [vmem:[%s4] sm:$0xf] %v337
    %354 = vst [vmem:[%s4 + $0x4] sm:$0xf] %v338
    %355 = vst [vmem:[%s4 + $0x8] sm:$0xf] %v339
    %356 = vst [vmem:[%s4 + $0xc] sm:$0xf] %v340
    %357 = vst [vmem:[%s4 + $0x10] sm:$0xf] %v341
    %358 = vst [vmem:[%s4 + $0x14] sm:$0xf] %v342
    %359 = vst [vmem:[%s4 + $0x18] sm:$0xf] %v343
    %360 = vst [vmem:[%s4 + $0x1c] sm:$0xf] %v344
    %361 = vst [vmem:[%s4 + $0x20] sm:$0xf] %v345
    %362 = vst [vmem:[%s4 + $0x24] sm:$0xf] %v346
    %363 = vst [vmem:[%s4 + $0x28] sm:$0xf] %v347
    %364 = vst [vmem:[%s4 + $0x2c] sm:$0xf] %v348
    %365 = vst [vmem:[%s4 + $0x30] sm:$0xf] %v349
    %366 = vst [vmem:[%s4 + $0x34] sm:$0xf] %v350
    %367 = vst [vmem:[%s4 + $0x38] sm:$0xf] %v351
    %368 = vst [vmem:[%s4 + $0x3c] sm:$0xf] %v352
  $region25: #{basic_block_forward.4} parent=0 // pred_fallthru
    _
  // Predicated region
  $region26: #{basic_block_forward.4} parent=0 // pred_check
    _
  $region27: #{basic_block_forward.4} parent=0 // pred_check_branch
    %370 = sbr.rel (0) target = $region29
  $region28: #{basic_block_forward.4} parent=0 // pred_region
    _
  $region29: #{basic_block_forward.4} parent=0 // pred_fallthru
    _
  // Predicated region
  $region30: #{basic_block_forward.4} parent=0 // pred_check
    _
  $region31: #{basic_block_forward.4} parent=0 // pred_check_branch
    %372 = sbr.rel (0) target = $region33
  $region32: #{basic_block_forward.4} parent=0 // pred_region
    _
  $region33: #{basic_block_forward.4} parent=0 // pred_fallthru
    _

// kernel: basic_block_forward.5
$region0: #{basic_block_forward.5}
  #allocation0 [shape = 'u32[]', space=smem, size = 0x4, offset = 0x4, fixed_abs, tag = 'smem constant byte address 0x4 - core index']
  #allocation1 [shape = 'u32[72,128]{1,0:T(1,128)}', space=vmem, size = 0x9000, scoped, tag = 'internal scratch']
  #allocation2 [shape = 'f32[128,128]{1,0:T(8,128)}', space=vmem, size = 0x10000, scoped, tag = 'scratch operand']
  %s0 = inlined_call_operand.vmem [shape: bf16[128,128], index: 0, kind: input, shape index: {}]
  %s1 = inlined_call_operand.vmem [shape: bf16[128,128], index: 1, kind: input, shape index: {}]
  %s2 = inlined_call_operand.vmem [shape: bf16[128,128], index: 2, kind: input, shape index: {}]
  %s3 = inlined_call_operand.vmem [shape: bf16[128,128], index: 3, kind: input, shape index: {}]
  %s4 = inlined_call_operand.vmem [shape: f32[128,128], index: 4, kind: output, shape index: {}]
  %s5 = sld [smem:[#allocation0]]
  $region34: #{basic_block_forward.5} parent=0
    _
  %s7 = ssub.s32 1, %s5
  %s8 = scalar_select 0, %s7, %s5
  // Predicated region
  $region2: #{basic_block_forward.5} parent=0 // pred_check
    _
  $region3: #{basic_block_forward.5} parent=0 // pred_check_branch
    %10 = sbr.rel (0) target = $region5
  $region4: #{basic_block_forward.5} parent=0 // pred_region
    _
  $region5: #{basic_block_forward.5} parent=0 // pred_fallthru
    _
  // Predicated region
  $region6: #{basic_block_forward.5} parent=0 // pred_check
    _
  $region7: #{basic_block_forward.5} parent=0 // pred_check_branch
    %12 = sbr.rel (0) target = $region9
  $region8: #{basic_block_forward.5} parent=0 // pred_region
    _
  $region9: #{basic_block_forward.5} parent=0 // pred_fallthru
    _
  // Predicated region
  $region10: #{basic_block_forward.5} parent=0 // pred_check
    _
  $region11: #{basic_block_forward.5} parent=0 // pred_check_branch
    %14 = sbr.rel (0) target = $region13
  $region12: #{basic_block_forward.5} parent=0 // pred_region
    _
  $region13: #{basic_block_forward.5} parent=0 // pred_fallthru
    _
  // Predicated region
  $region14: #{basic_block_forward.5} parent=0 // pred_check
    _
  $region15: #{basic_block_forward.5} parent=0 // pred_check_branch
    %16 = sbr.rel (0) target = $region17
  $region16: #{basic_block_forward.5} parent=0 // pred_region
    _
  $region17: #{basic_block_forward.5} parent=0 // pred_fallthru
    _
  %p17 = scmp.eq.s32.totalorder 0, 0
  // Predicated region
  $region18: #{basic_block_forward.5} parent=0 // pred_check
    %p18 = pneg %p17
  $region19: #{basic_block_forward.5} parent=0 // pred_check_branch
    %20 = sbr.rel (%p18) target = $region21
  $region20: #{basic_block_forward.5} parent=0 // pred_region
    %v21 = vld [vmem:[%s2] sm:$0xf]
    %v22 = vld [vmem:[%s2 + $0x4] sm:$0xf]
    %v23 = vld [vmem:[%s2 + $0x8] sm:$0xf]
    %v24 = vld [vmem:[%s2 + $0xc] sm:$0xf]
    %v25 = vld [vmem:[%s2 + $0x10] sm:$0xf]
    %v26 = vld [vmem:[%s2 + $0x14] sm:$0xf]
    %v27 = vld [vmem:[%s2 + $0x18] sm:$0xf]
    %v28 = vld [vmem:[%s2 + $0x1c] sm:$0xf]
    %v29 = vld [vmem:[%s2 + $0x20] sm:$0xf]
    %v30 = vld [vmem:[%s2 + $0x24] sm:$0xf]
    %v31 = vld [vmem:[%s2 + $0x28] sm:$0xf]
    %v32 = vld [vmem:[%s2 + $0x2c] sm:$0xf]
    %v33 = vld [vmem:[%s2 + $0x30] sm:$0xf]
    %v34 = vld [vmem:[%s2 + $0x34] sm:$0xf]
    %v35 = vld [vmem:[%s2 + $0x38] sm:$0xf]
    %v36 = vld [vmem:[%s2 + $0x3c] sm:$0xf]
    %v37 = vld [vmem:[%s3] sm:$0xf]
    %v38 = vld [vmem:[%s3 + $0x4] sm:$0xf]
    %v39 = vld [vmem:[%s3 + $0x8] sm:$0xf]
    %v40 = vld [vmem:[%s3 + $0xc] sm:$0xf]
    %v41 = vld [vmem:[%s3 + $0x10] sm:$0xf]
    %v42 = vld [vmem:[%s3 + $0x14] sm:$0xf]
    %v43 = vld [vmem:[%s3 + $0x18] sm:$0xf]
    %v44 = vld [vmem:[%s3 + $0x1c] sm:$0xf]
    %v45 = vld [vmem:[%s3 + $0x20] sm:$0xf]
    %v46 = vld [vmem:[%s3 + $0x24] sm:$0xf]
    %v47 = vld [vmem:[%s3 + $0x28] sm:$0xf]
    %v48 = vld [vmem:[%s3 + $0x2c] sm:$0xf]
    %v49 = vld [vmem:[%s3 + $0x30] sm:$0xf]
    %v50 = vld [vmem:[%s3 + $0x34] sm:$0xf]
    %v51 = vld [vmem:[%s3 + $0x38] sm:$0xf]
    %v52 = vld [vmem:[%s3 + $0x3c] sm:$0xf]
    %v69 = vunpack.c.l.b16 %v21
    %v70 = vunpack.c.l.b16 %v22
    %v71 = vunpack.c.l.b16 %v23
    %v72 = vunpack.c.l.b16 %v24
    %v73 = vunpack.c.l.b16 %v25
    %v74 = vunpack.c.l.b16 %v26
    %v75 = vunpack.c.l.b16 %v27
    %v76 = vunpack.c.l.b16 %v28
    %v77 = vunpack.c.l.b16 %v29
    %v78 = vunpack.c.l.b16 %v30
    %v79 = vunpack.c.l.b16 %v31
    %v80 = vunpack.c.l.b16 %v32
    %v81 = vunpack.c.l.b16 %v33
    %v82 = vunpack.c.l.b16 %v34
    %v83 = vunpack.c.l.b16 %v35
    %v84 = vunpack.c.l.b16 %v36
    %v85 = vpack.c.b16 %v70, %v69
    %v86 = vpack.c.b16 %v72, %v71
    %v87 = vpack.c.b16 %v74, %v73
    %v88 = vpack.c.b16 %v76, %v75
    %v89 = vpack.c.b16 %v78, %v77
    %v90 = vpack.c.b16 %v80, %v79
    %v91 = vpack.c.b16 %v82, %v81
    %v92 = vpack.c.b16 %v84, %v83
    %v117 = vunpack.c.l.b16 %v37
    %v118 = vunpack.c.l.b16 %v38
    %v119 = vunpack.c.l.b16 %v39
    %v120 = vunpack.c.l.b16 %v40
    %v121 = vunpack.c.l.b16 %v41
    %v122 = vunpack.c.l.b16 %v42
    %v123 = vunpack.c.l.b16 %v43
    %v124 = vunpack.c.l.b16 %v44
    %v125 = vunpack.c.l.b16 %v45
    %v126 = vunpack.c.l.b16 %v46
    %v127 = vunpack.c.l.b16 %v47
    %v128 = vunpack.c.l.b16 %v48
    %v129 = vunpack.c.l.b16 %v49
    %v130 = vunpack.c.l.b16 %v50
    %v131 = vunpack.c.l.b16 %v51
    %v132 = vunpack.c.l.b16 %v52
    %v133 = vpack.c.b16 %v118, %v117
    %v134 = vpack.c.b16 %v120, %v119
    %v135 = vpack.c.b16 %v122, %v121
    %v136 = vpack.c.b16 %v124, %v123
    %v137 = vpack.c.b16 %v126, %v125
    %v138 = vpack.c.b16 %v128, %v127
    %v139 = vpack.c.b16 %v130, %v129
    %v140 = vpack.c.b16 %v132, %v131
    %149 = vmatpush.bf16.msra.mxu0 %v140
    %150 = vmatpush.bf16.msra.mxu0 %v139
    %151 = vmatpush.bf16.msra.mxu0 %v138
    %152 = vmatpush.bf16.msra.mxu0 %v137
    %153 = vmatpush.bf16.msra.mxu0 %v136
    %154 = vmatpush.bf16.msra.mxu0 %v135
    %155 = vmatpush.bf16.msra.mxu0 %v134
    %156 = vmatpush.bf16.msra.mxu0 %v133
    %157 = vmatmul.bf16.gmra.mxu0 %v85
    %v158 = vpop.f32.mrf.mxu0
    %v159 = vadd.f32 0.0, %v158
    %v160 = vpop.f32.mrf.mxu0
    %v161 = vadd.f32 0.0, %v160
    %162 = vmatmul.bf16.gmra.mxu0 %v86
    %v163 = vpop.f32.mrf.mxu0
    %v164 = vadd.f32 0.0, %v163
    %v165 = vpop.f32.mrf.mxu0
    %v166 = vadd.f32 0.0, %v165
    %167 = vmatmul.bf16.gmra.mxu0 %v87
    %v168 = vpop.f32.mrf.mxu0
    %v169 = vadd.f32 0.0, %v168
    %v170 = vpop.f32.mrf.mxu0
    %v171 = vadd.f32 0.0, %v170
    %172 = vmatmul.bf16.gmra.mxu0 %v88
    %v173 = vpop.f32.mrf.mxu0
    %v174 = vadd.f32 0.0, %v173
    %v175 = vpop.f32.mrf.mxu0
    %v176 = vadd.f32 0.0, %v175
    %177 = vmatmul.bf16.gmra.mxu0 %v89
    %v178 = vpop.f32.mrf.mxu0
    %v179 = vadd.f32 0.0, %v178
    %v180 = vpop.f32.mrf.mxu0
    %v181 = vadd.f32 0.0, %v180
    %182 = vmatmul.bf16.gmra.mxu0 %v90
    %v183 = vpop.f32.mrf.mxu0
    %v184 = vadd.f32 0.0, %v183
    %v185 = vpop.f32.mrf.mxu0
    %v186 = vadd.f32 0.0, %v185
    %187 = vmatmul.bf16.gmra.mxu0 %v91
    %v188 = vpop.f32.mrf.mxu0
    %v189 = vadd.f32 0.0, %v188
    %v190 = vpop.f32.mrf.mxu0
    %v191 = vadd.f32 0.0, %v190
    %192 = vmatmul.bf16.gmra.mxu0 %v92
    %v193 = vpop.f32.mrf.mxu0
    %v194 = vadd.f32 0.0, %v193
    %v195 = vpop.f32.mrf.mxu0
    %v196 = vadd.f32 0.0, %v195
    %197 = vdwg.mxu0
    %198 = vst [vmem:[#allocation2] sm:$0xff] %v159
    %199 = vst [vmem:[#allocation2 + $0x8] sm:$0xff] %v161
    %200 = vst [vmem:[#allocation2 + $0x10] sm:$0xff] %v164
    %201 = vst [vmem:[#allocation2 + $0x18] sm:$0xff] %v166
    %202 = vst [vmem:[#allocation2 + $0x20] sm:$0xff] %v169
    %203 = vst [vmem:[#allocation2 + $0x28] sm:$0xff] %v171
    %204 = vst [vmem:[#allocation2 + $0x30] sm:$0xff] %v174
    %205 = vst [vmem:[#allocation2 + $0x38] sm:$0xff] %v176
    %206 = vst [vmem:[#allocation2 + $0x40] sm:$0xff] %v179
    %207 = vst [vmem:[#allocation2 + $0x48] sm:$0xff] %v181
    %208 = vst [vmem:[#allocation2 + $0x50] sm:$0xff] %v184
    %209 = vst [vmem:[#allocation2 + $0x58] sm:$0xff] %v186
    %210 = vst [vmem:[#allocation2 + $0x60] sm:$0xff] %v189
    %211 = vst [vmem:[#allocation2 + $0x68] sm:$0xff] %v191
    %212 = vst [vmem:[#allocation2 + $0x70] sm:$0xff] %v194
    %213 = vst [vmem:[#allocation2 + $0x78] sm:$0xff] %v196
  $region21: #{basic_block_forward.5} parent=0 // pred_fallthru
    _
  %v214 = vld [vmem:[#allocation2] sm:$0xff]
  %v215 = vld [vmem:[#allocation2 + $0x8] sm:$0xff]
  %v216 = vld [vmem:[#allocation2 + $0x10] sm:$0xff]
  %v217 = vld [vmem:[#allocation2 + $0x18] sm:$0xff]
  %v218 = vld [vmem:[#allocation2 + $0x20] sm:$0xff]
  %v219 = vld [vmem:[#allocation2 + $0x28] sm:$0xff]
  %v220 = vld [vmem:[#allocation2 + $0x30] sm:$0xff]
  %v221 = vld [vmem:[#allocation2 + $0x38] sm:$0xff]
  %v222 = vld [vmem:[#allocation2 + $0x40] sm:$0xff]
  %v223 = vld [vmem:[#allocation2 + $0x48] sm:$0xff]
  %v224 = vld [vmem:[#allocation2 + $0x50] sm:$0xff]
  %v225 = vld [vmem:[#allocation2 + $0x58] sm:$0xff]
  %v226 = vld [vmem:[#allocation2 + $0x60] sm:$0xff]
  %v227 = vld [vmem:[#allocation2 + $0x68] sm:$0xff]
  %v228 = vld [vmem:[#allocation2 + $0x70] sm:$0xff]
  %v229 = vld [vmem:[#allocation2 + $0x78] sm:$0xff]
  %v230 = vld [vmem:[%s0] sm:$0xf]
  %v231 = vld [vmem:[%s0 + $0x4] sm:$0xf]
  %v232 = vld [vmem:[%s0 + $0x8] sm:$0xf]
  %v233 = vld [vmem:[%s0 + $0xc] sm:$0xf]
  %v234 = vld [vmem:[%s0 + $0x10] sm:$0xf]
  %v235 = vld [vmem:[%s0 + $0x14] sm:$0xf]
  %v236 = vld [vmem:[%s0 + $0x18] sm:$0xf]
  %v237 = vld [vmem:[%s0 + $0x1c] sm:$0xf]
  %v238 = vld [vmem:[%s0 + $0x20] sm:$0xf]
  %v239 = vld [vmem:[%s0 + $0x24] sm:$0xf]
  %v240 = vld [vmem:[%s0 + $0x28] sm:$0xf]
  %v241 = vld [vmem:[%s0 + $0x2c] sm:$0xf]
  %v242 = vld [vmem:[%s0 + $0x30] sm:$0xf]
  %v243 = vld [vmem:[%s0 + $0x34] sm:$0xf]
  %v244 = vld [vmem:[%s0 + $0x38] sm:$0xf]
  %v245 = vld [vmem:[%s0 + $0x3c] sm:$0xf]
  %v246 = vld [vmem:[%s1] sm:$0xf]
  %v247 = vld [vmem:[%s1 + $0x4] sm:$0xf]
  %v248 = vld [vmem:[%s1 + $0x8] sm:$0xf]
  %v249 = vld [vmem:[%s1 + $0xc] sm:$0xf]
  %v250 = vld [vmem:[%s1 + $0x10] sm:$0xf]
  %v251 = vld [vmem:[%s1 + $0x14] sm:$0xf]
  %v252 = vld [vmem:[%s1 + $0x18] sm:$0xf]
  %v253 = vld [vmem:[%s1 + $0x1c] sm:$0xf]
  %v254 = vld [vmem:[%s1 + $0x20] sm:$0xf]
  %v255 = vld [vmem:[%s1 + $0x24] sm:$0xf]
  %v256 = vld [vmem:[%s1 + $0x28] sm:$0xf]
  %v257 = vld [vmem:[%s1 + $0x2c] sm:$0xf]
  %v258 = vld [vmem:[%s1 + $0x30] sm:$0xf]
  %v259 = vld [vmem:[%s1 + $0x34] sm:$0xf]
  %v260 = vld [vmem:[%s1 + $0x38] sm:$0xf]
  %v261 = vld [vmem:[%s1 + $0x3c] sm:$0xf]
  %v278 = vunpack.c.l.b16 %v230
  %v279 = vunpack.c.l.b16 %v231
  %v280 = vunpack.c.l.b16 %v232
  %v281 = vunpack.c.l.b16 %v233
  %v282 = vunpack.c.l.b16 %v234
  %v283 = vunpack.c.l.b16 %v235
  %v284 = vunpack.c.l.b16 %v236
  %v285 = vunpack.c.l.b16 %v237
  %v286 = vunpack.c.l.b16 %v238
  %v287 = vunpack.c.l.b16 %v239
  %v288 = vunpack.c.l.b16 %v240
  %v289 = vunpack.c.l.b16 %v241
  %v290 = vunpack.c.l.b16 %v242
  %v291 = vunpack.c.l.b16 %v243
  %v292 = vunpack.c.l.b16 %v244
  %v293 = vunpack.c.l.b16 %v245
  %v294 = vpack.c.b16 %v279, %v278
  %v295 = vpack.c.b16 %v281, %v280
  %v296 = vpack.c.b16 %v283, %v282
  %v297 = vpack.c.b16 %v285, %v284
  %v298 = vpack.c.b16 %v287, %v286
  %v299 = vpack.c.b16 %v289, %v288
  %v300 = vpack.c.b16 %v291, %v290
  %v301 = vpack.c.b16 %v293, %v292
  %v326 = vunpack.c.l.b16 %v246
  %v327 = vunpack.c.l.b16 %v247
  %v328 = vunpack.c.l.b16 %v248
  %v329 = vunpack.c.l.b16 %v249
  %v330 = vunpack.c.l.b16 %v250
  %v331 = vunpack.c.l.b16 %v251
  %v332 = vunpack.c.l.b16 %v252
  %v333 = vunpack.c.l.b16 %v253
  %v334 = vunpack.c.l.b16 %v254
  %v335 = vunpack.c.l.b16 %v255
  %v336 = vunpack.c.l.b16 %v256
  %v337 = vunpack.c.l.b16 %v257
  %v338 = vunpack.c.l.b16 %v258
  %v339 = vunpack.c.l.b16 %v259
  %v340 = vunpack.c.l.b16 %v260
  %v341 = vunpack.c.l.b16 %v261
  %v342 = vpack.c.b16 %v327, %v326
  %v343 = vpack.c.b16 %v329, %v328
  %v344 = vpack.c.b16 %v331, %v330
  %v345 = vpack.c.b16 %v333, %v332
  %v346 = vpack.c.b16 %v335, %v334
  %v347 = vpack.c.b16 %v337, %v336
  %v348 = vpack.c.b16 %v339, %v338
  %v349 = vpack.c.b16 %v341, %v340
  %358 = vmatpush.bf16.msra.mxu0 %v349
  %359 = vmatpush.bf16.msra.mxu0 %v348
  %360 = vmatpush.bf16.msra.mxu0 %v347
  %361 = vmatpush.bf16.msra.mxu0 %v346
  %362 = vmatpush.bf16.msra.mxu0 %v345
  %363 = vmatpush.bf16.msra.mxu0 %v344
  %364 = vmatpush.bf16.msra.mxu0 %v343
  %365 = vmatpush.bf16.msra.mxu0 %v342
  %366 = vmatmul.bf16.gmra.mxu0 %v294
  %v367 = vpop.f32.mrf.mxu0
  %v368 = vadd.f32 0.0, %v367
  %v369 = vpop.f32.mrf.mxu0
  %v370 = vadd.f32 0.0, %v369
  %371 = vmatmul.bf16.gmra.mxu0 %v295
  %v372 = vpop.f32.mrf.mxu0
  %v373 = vadd.f32 0.0, %v372
  %v374 = vpop.f32.mrf.mxu0
  %v375 = vadd.f32 0.0, %v374
  %376 = vmatmul.bf16.gmra.mxu0 %v296
  %v377 = vpop.f32.mrf.mxu0
  %v378 = vadd.f32 0.0, %v377
  %v379 = vpop.f32.mrf.mxu0
  %v380 = vadd.f32 0.0, %v379
  %381 = vmatmul.bf16.gmra.mxu0 %v297
  %v382 = vpop.f32.mrf.mxu0
  %v383 = vadd.f32 0.0, %v382
  %v384 = vpop.f32.mrf.mxu0
  %v385 = vadd.f32 0.0, %v384
  %386 = vmatmul.bf16.gmra.mxu0 %v298
  %v387 = vpop.f32.mrf.mxu0
  %v388 = vadd.f32 0.0, %v387
  %v389 = vpop.f32.mrf.mxu0
  %v390 = vadd.f32 0.0, %v389
  %391 = vmatmul.bf16.gmra.mxu0 %v299
  %v392 = vpop.f32.mrf.mxu0
  %v393 = vadd.f32 0.0, %v392
  %v394 = vpop.f32.mrf.mxu0
  %v395 = vadd.f32 0.0, %v394
  %396 = vmatmul.bf16.gmra.mxu0 %v300
  %v397 = vpop.f32.mrf.mxu0
  %v398 = vadd.f32 0.0, %v397
  %v399 = vpop.f32.mrf.mxu0
  %v400 = vadd.f32 0.0, %v399
  %401 = vmatmul.bf16.gmra.mxu0 %v301
  %v402 = vpop.f32.mrf.mxu0
  %v403 = vadd.f32 0.0, %v402
  %v404 = vpop.f32.mrf.mxu0
  %v405 = vadd.f32 0.0, %v404
  %406 = vdwg.mxu0
  %v407 = vadd.f32 %v214, %v368
  %v408 = vadd.f32 %v215, %v370
  %v409 = vadd.f32 %v216, %v373
  %v410 = vadd.f32 %v217, %v375
  %v411 = vadd.f32 %v218, %v378
  %v412 = vadd.f32 %v219, %v380
  %v413 = vadd.f32 %v220, %v383
  %v414 = vadd.f32 %v221, %v385
  %v415 = vadd.f32 %v222, %v388
  %v416 = vadd.f32 %v223, %v390
  %v417 = vadd.f32 %v224, %v393
  %v418 = vadd.f32 %v225, %v395
  %v419 = vadd.f32 %v226, %v398
  %v420 = vadd.f32 %v227, %v400
  %v421 = vadd.f32 %v228, %v403
  %v422 = vadd.f32 %v229, %v405
  %423 = vst [vmem:[#allocation2] sm:$0xff] %v407
  %424 = vst [vmem:[#allocation2 + $0x8] sm:$0xff] %v408
  %425 = vst [vmem:[#allocation2 + $0x10] sm:$0xff] %v409
  %426 = vst [vmem:[#allocation2 + $0x18] sm:$0xff] %v410
  %427 = vst [vmem:[#allocation2 + $0x20] sm:$0xff] %v411
  %428 = vst [vmem:[#allocation2 + $0x28] sm:$0xff] %v412
  %429 = vst [vmem:[#allocation2 + $0x30] sm:$0xff] %v413
  %430 = vst [vmem:[#allocation2 + $0x38] sm:$0xff] %v414
  %431 = vst [vmem:[#allocation2 + $0x40] sm:$0xff] %v415
  %432 = vst [vmem:[#allocation2 + $0x48] sm:$0xff] %v416
  %433 = vst [vmem:[#allocation2 + $0x50] sm:$0xff] %v417
  %434 = vst [vmem:[#allocation2 + $0x58] sm:$0xff] %v418
  %435 = vst [vmem:[#allocation2 + $0x60] sm:$0xff] %v419
  %436 = vst [vmem:[#allocation2 + $0x68] sm:$0xff] %v420
  %437 = vst [vmem:[#allocation2 + $0x70] sm:$0xff] %v421
  %438 = vst [vmem:[#allocation2 + $0x78] sm:$0xff] %v422
  // Predicated region
  $region22: #{basic_block_forward.5} parent=0 // pred_check
    %p439 = pneg %p17
  $region23: #{basic_block_forward.5} parent=0 // pred_check_branch
    %441 = sbr.rel (%p439) target = $region25
  $region24: #{basic_block_forward.5} parent=0 // pred_region
    %v442 = vld [vmem:[#allocation2] sm:$0xff]
    %v443 = vld [vmem:[#allocation2 + $0x8] sm:$0xff]
    %v444 = vld [vmem:[#allocation2 + $0x10] sm:$0xff]
    %v445 = vld [vmem:[#allocation2 + $0x18] sm:$0xff]
    %v446 = vld [vmem:[#allocation2 + $0x20] sm:$0xff]
    %v447 = vld [vmem:[#allocation2 + $0x28] sm:$0xff]
    %v448 = vld [vmem:[#allocation2 + $0x30] sm:$0xff]
    %v449 = vld [vmem:[#allocation2 + $0x38] sm:$0xff]
    %v450 = vld [vmem:[#allocation2 + $0x40] sm:$0xff]
    %v451 = vld [vmem:[#allocation2 + $0x48] sm:$0xff]
    %v452 = vld [vmem:[#allocation2 + $0x50] sm:$0xff]
    %v453 = vld [vmem:[#allocation2 + $0x58] sm:$0xff]
    %v454 = vld [vmem:[#allocation2 + $0x60] sm:$0xff]
    %v455 = vld [vmem:[#allocation2 + $0x68] sm:$0xff]
    %v456 = vld [vmem:[#allocation2 + $0x70] sm:$0xff]
    %v457 = vld [vmem:[#allocation2 + $0x78] sm:$0xff]
    %458 = vst [vmem:[%s4] sm:$0xff] %v442
    %459 = vst [vmem:[%s4 + $0x8] sm:$0xff] %v443
    %460 = vst [vmem:[%s4 + $0x10] sm:$0xff] %v444
    %461 = vst [vmem:[%s4 + $0x18] sm:$0xff] %v445
    %462 = vst [vmem:[%s4 + $0x20] sm:$0xff] %v446
    %463 = vst [vmem:[%s4 + $0x28] sm:$0xff] %v447
    %464 = vst [vmem:[%s4 + $0x30] sm:$0xff] %v448
    %465 = vst [vmem:[%s4 + $0x38] sm:$0xff] %v449
    %466 = vst [vmem:[%s4 + $0x40] sm:$0xff] %v450
    %467 = vst [vmem:[%s4 + $0x48] sm:$0xff] %v451
    %468 = vst [vmem:[%s4 + $0x50] sm:$0xff] %v452
    %469 = vst [vmem:[%s4 + $0x58] sm:$0xff] %v453
    %470 = vst [vmem:[%s4 + $0x60] sm:$0xff] %v454
    %471 = vst [vmem:[%s4 + $0x68] sm:$0xff] %v455
    %472 = vst [vmem:[%s4 + $0x70] sm:$0xff] %v456
    %473 = vst [vmem:[%s4 + $0x78] sm:$0xff] %v457
  $region25: #{basic_block_forward.5} parent=0 // pred_fallthru
    _
  // Predicated region
  $region26: #{basic_block_forward.5} parent=0 // pred_check
    _
  $region27: #{basic_block_forward.5} parent=0 // pred_check_branch
    %475 = sbr.rel (0) target = $region29
  $region28: #{basic_block_forward.5} parent=0 // pred_region
    _
  $region29: #{basic_block_forward.5} parent=0 // pred_fallthru
    _
  // Predicated region
  $region30: #{basic_block_forward.5} parent=0 // pred_check
    _
  $region31: #{basic_block_forward.5} parent=0 // pred_check_branch
    %477 = sbr.rel (0) target = $region33
  $region32: #{basic_block_forward.5} parent=0 // pred_region
    _
  $region33: #{basic_block_forward.5} parent=0 // pred_fallthru
    _

</llo_original>
